<compile_context>
chip_gen: v7x
topology: tpu7x:2x2x1
jax: 0.10.0
libtpu: 0.0.40
codegen_flags: <defaults>
</compile_context>

<pallas_src>
import functools
import math

import jax
import jax.numpy as jnp
from jax.experimental import pallas as pl
from jax.experimental.pallas import tpu as pltpu


def _round_up(x, m):
    return -(-x // m) * m


def textcnn_kernel(emb_ref, wconv_ref, dw_ref, db_ref, ow_ref, ob_ref,
                   out_ref, *, F, ZP):
    TB, S, H = emb_ref.shape

    # --- single fused conv matmul over all 12 taps (bf16 in, f32 acc) --------
    # Output dim is padded to ZP (=128) lanes -> lane-dense z.
    emb2d = emb_ref[...].reshape(TB * S, H)                    # bf16 (TB*S, H)
    z = jnp.dot(emb2d, wconv_ref[...],
                preferred_element_type=jnp.float32)            # (TB*S, ZP) f32
    z = z.reshape(TB, S, ZP)

    # --- per-k shift-add + max-pool over time (f32 VPU/XLU work) -------------
    def conv_max(k, base):
        T = S - k + 1
        acc = z[:, 0:T, base * F:(base + 1) * F]               # dk = 0 tap
        for dk in range(1, k):                                  # static unroll
            acc = acc + z[:, dk:dk + T,
                          (base + dk) * F:(base + dk + 1) * F]
        return jnp.max(acc, axis=1)                             # (TB, F)

    m3 = conv_max(3, 0)
    m4 = conv_max(4, 3)
    m5 = conv_max(5, 7)

    # relu(concat(max_k)) == concat(relu(max_k)); pad to the lane-dense dense
    # width DP so both following matmuls are full 128-lane blocks.
    DP = dw_ref.shape[0]
    parts = [m3, m4, m5]
    if DP > 3 * F:
        parts.append(jnp.zeros((TB, DP - 3 * F), jnp.float32))
    pooled = jnp.maximum(jnp.concatenate(parts, axis=-1), 0.0)  # (TB, DP)

    # --- dense -> relu -> out (bf16 MXU inputs, f32 acc + f32 bias/relu) -----
    h = jnp.dot(pooled.astype(jnp.bfloat16), dw_ref[...],
                preferred_element_type=jnp.float32) + db_ref[...]     # (TB, DP)
    h = jnp.maximum(h, 0.0)
    out_ref[...] = jnp.dot(h.astype(jnp.bfloat16), ow_ref[...],
                           preferred_element_type=jnp.float32) + ob_ref[...]


def _pick_block_b(B, S, H, zp, vmem_budget_bytes=20 << 20, max_block=512):
    """Largest batch tile that (a) fits the VMEM budget (double-buffered bf16 emb
    + f32 conv intermediate), (b) keeps block_b*S aligned to 256 for the MXU M
    dim, and (c) leaves >= 4 grid steps when the batch allows (v7x megacore)."""
    bytes_per_row = S * (2 * 2 * H + 4 * zp)      # 2x-buffered bf16 emb + f32 z
    bb = max(8, min(max_block, vmem_budget_bytes // bytes_per_row))
    align = max(8, 256 // math.gcd(S, 256))        # block_b*S % 256 == 0 if possible
    if align > bb:
        align = 8
    bb = max(align, (bb // align) * align)
    b_ceil = _round_up(B, align)
    bb = min(bb, max(align, _round_up(-(-b_ceil // 4), align)))
    bb = min(bb, b_ceil)
    return int(bb)


def textcnn_forward(emb, w3, w4, w5, dw, db, ow, ob, *, block_b=None):
    """emb: (B, S, H) f32.  conv weights w{3,4,5}: (k, H, F).  dw: (3F, 3F),
    db: (1, 3F), ow: (3F, C), ob: (1, C)."""
    B, S, H = emb.shape
    F = w3.shape[-1]
    C = ow.shape[-1]
    ZP = _round_up(12 * F, 128)      # lane-dense fused-conv output dim
    DP = _round_up(3 * F, 128)       # lane-dense dense in/out dim
    CPAD = _round_up(C, 128)         # lane-dense class dim

    if block_b is None:
        block_b = _pick_block_b(B, S, H, ZP)

    # Fuse the 12 conv taps into one (H, ZP) matrix (zero-padded); bf16 for MXU.
    wconv = jnp.concatenate([w3[i] for i in range(3)]
                            + [w4[i] for i in range(4)]
                            + [w5[i] for i in range(5)], axis=-1)      # (H, 12F)
    wconv = jnp.pad(wconv, ((0, 0), (0, ZP - 12 * F))).astype(jnp.bfloat16)

    # Pad batch to a multiple of the batch tile; stream activations as bf16.
    emb_b = emb.astype(jnp.bfloat16)
    B_pad = _round_up(B, block_b)
    if B_pad != B:
        emb_b = jnp.pad(emb_b, ((0, B_pad - B), (0, 0), (0, 0)))

    # Zero-pad dense/out params so intermediates + output store are lane-dense.
    dw_p = jnp.pad(dw, ((0, DP - dw.shape[0]),
                        (0, DP - dw.shape[1]))).astype(jnp.bfloat16)   # (DP, DP)
    db_p = jnp.pad(db, ((0, 0), (0, DP - db.shape[1])))                # (1, DP)
    ow_p = jnp.pad(ow, ((0, DP - ow.shape[0]),
                        (0, CPAD - ow.shape[1]))).astype(jnp.bfloat16) # (DP, CPAD)
    ob_p = jnp.pad(ob, ((0, 0), (0, CPAD - ob.shape[1])))              # (1, CPAD)

    kernel = functools.partial(textcnn_kernel, F=F, ZP=ZP)

    # Per-step VMEM footprint (for the compiler limit) and an advisory cost hint.
    weight_bytes = H * ZP * 2 + DP * DP * 2 + DP * CPAD * 2 + (DP + CPAD) * 4
    vmem_bytes = (2 * block_b * S * H * 2          # double-buffered bf16 emb
                  + block_b * S * ZP * 4           # f32 z intermediate
                  + 2 * block_b * CPAD * 4         # double-buffered f32 output
                  + weight_bytes)
    vmem_limit = int(min(48 << 20, max(32 << 20, 2 * vmem_bytes)))

    flops = 2 * B_pad * S * H * ZP + 2 * B_pad * DP * DP + 2 * B_pad * DP * CPAD
    bytes_accessed = B_pad * S * H * 2 + B_pad * CPAD * 4 + weight_bytes

    out = pl.pallas_call(
        kernel,
        out_shape=jax.ShapeDtypeStruct((B_pad, CPAD), jnp.float32),
        grid=(B_pad // block_b,),
        in_specs=[
            pl.BlockSpec((block_b, S, H), lambda i: (i, 0, 0)),   # streamed
            pl.BlockSpec((H, ZP), lambda i: (0, 0)),              # resident
            pl.BlockSpec((DP, DP), lambda i: (0, 0)),             # resident
            pl.BlockSpec((1, DP), lambda i: (0, 0)),              # resident
            pl.BlockSpec((DP, CPAD), lambda i: (0, 0)),           # resident
            pl.BlockSpec((1, CPAD), lambda i: (0, 0)),            # resident
        ],
        out_specs=pl.BlockSpec((block_b, CPAD), lambda i: (i, 0)),
        compiler_params=pltpu.CompilerParams(
            dimension_semantics=("parallel",),
            vmem_limit_bytes=vmem_limit),
        cost_estimate=pl.CostEstimate(
            flops=int(flops), transcendentals=0,
            bytes_accessed=int(bytes_accessed)),
    )(emb_b, wconv, dw_p, db_p, ow_p, ob_p)

    return out[:B, :C]


def reference_forward(emb, w3, w4, w5, dw, db, ow, ob):
    """Pure-JAX f32 mirror of the PyTorch forward (dropout = identity)."""
    B, S, H = emb.shape

    def conv_max(w, k):
        T = S - k + 1
        acc = jnp.zeros((B, T, w.shape[-1]), jnp.float32)
        for dk in range(k):
            acc = acc + jnp.einsum('bth,hf->btf', emb[:, dk:dk + T, :], w[dk])
        return jnp.max(acc, axis=1)

    combined = jnp.concatenate(
        [conv_max(w3, 3), conv_max(w4, 4), conv_max(w5, 5)], axis=-1)
    combined = jnp.maximum(combined, 0.0)
    h = jnp.maximum(combined @ dw + db, 0.0)
    return h @ ow + ob


if __name__ == "__main__":
    vocab_size, hidden_dim, filter_num, class_num = 50, 32, 8, 4
    B, S = 2, 16

    key = jax.random.PRNGKey(0)
    k_emb, k_ids, k_w3, k_w4, k_w5, k_dw, k_db, k_ow, k_ob = jax.random.split(key, 9)

    # Parameters (deterministic synthetic init; PyTorch weight layouts transposed
    # up-front so the kernel works on (k, H, F) / (in, out) matrices).
    emb_table = jax.random.normal(k_emb, (vocab_size, hidden_dim), jnp.float32) * 0.1
    w3 = jax.random.normal(k_w3, (3, hidden_dim, filter_num), jnp.float32) * 0.1
    w4 = jax.random.normal(k_w4, (4, hidden_dim, filter_num), jnp.float32) * 0.1
    w5 = jax.random.normal(k_w5, (5, hidden_dim, filter_num), jnp.float32) * 0.1
    dw = jax.random.normal(k_dw, (3 * filter_num, 3 * filter_num), jnp.float32) * 0.1
    db = jax.random.normal(k_db, (1, 3 * filter_num), jnp.float32) * 0.1
    ow = jax.random.normal(k_ow, (3 * filter_num, class_num), jnp.float32) * 0.1
    ob = jax.random.normal(k_ob, (1, class_num), jnp.float32) * 0.1

    # Inputs: token ids (B, S); embedding lookup (a gather) stays in plain JAX glue.
    inputs = jax.random.randint(k_ids, (B, S), 0, vocab_size, jnp.int32)
    emb = emb_table[inputs]                  # (B, S, H) f32

    out = textcnn_forward(emb, w3, w4, w5, dw, db, ow, ob)
    out = jax.block_until_ready(out)

    ref = reference_forward(emb, w3, w4, w5, dw, db, ow, ob)
    assert out.shape == (B, class_num)
    # bf16 MXU inputs (conv + dense, f32 accumulation) vs f32 reference.
    assert jnp.allclose(out, ref, atol=2e-2, rtol=2e-2), (out, ref)

    print("KERNEL_OK")
</pallas_src>

<mosaic_0001>
module attributes {stable_mosaic.version = 11 : i64} {
  func.func @textcnn_kernel(%arg0: i32, %arg1: memref<16x16x32xbf16, #tpu.memory_space<vmem>>, %arg2: memref<32x128xbf16, #tpu.memory_space<vmem>>, %arg3: memref<128x128xbf16, #tpu.memory_space<vmem>>, %arg4: memref<1x128xf32, #tpu.memory_space<vmem>>, %arg5: memref<128x128xbf16, #tpu.memory_space<vmem>>, %arg6: memref<1x128xf32, #tpu.memory_space<vmem>>, %arg7: memref<16x128xf32, #tpu.memory_space<vmem>>) attributes {dimension_semantics = [#tpu.dimension_semantics<parallel>], iteration_bounds = array<i64: 1>, scalar_prefetch = 0 : i64, scratch_operands = 0 : i64, tpu.core_type = #tpu.core_type<tc>, window_params = [{transform_indices = @transform_0, window_bounds = array<i64: 16, 16, 32>}, {pipeline_mode = #tpu.pipeline_mode<synchronous>, transform_indices = @transform_1, window_bounds = array<i64: 32, 128>}, {pipeline_mode = #tpu.pipeline_mode<synchronous>, transform_indices = @transform_2, window_bounds = array<i64: 128, 128>}, {pipeline_mode = #tpu.pipeline_mode<synchronous>, transform_indices = @transform_3, window_bounds = array<i64: 1, 128>}, {pipeline_mode = #tpu.pipeline_mode<synchronous>, transform_indices = @transform_4, window_bounds = array<i64: 128, 128>}, {pipeline_mode = #tpu.pipeline_mode<synchronous>, transform_indices = @transform_5, window_bounds = array<i64: 1, 128>}, {transform_indices = @transform_6, window_bounds = array<i64: 16, 128>}]} {
    %c0 = arith.constant 0 : index
    %c0_0 = arith.constant 0 : index
    %c0_1 = arith.constant 0 : index
    %0 = vector.load %arg1[%c0, %c0_0, %c0_1] : memref<16x16x32xbf16, #tpu.memory_space<vmem>>, vector<16x16x32xbf16>
    %1 = vector.shape_cast %0 : vector<16x16x32xbf16> to vector<256x32xbf16>
    %c0_2 = arith.constant 0 : index
    %c0_3 = arith.constant 0 : index
    %2 = vector.load %arg2[%c0_2, %c0_3] : memref<32x128xbf16, #tpu.memory_space<vmem>>, vector<32x128xbf16>
    %cst = arith.constant dense<0.000000e+00> : vector<256x128xf32>
    %3 = tpu.matmul %1, %2, %cst {dimension_numbers = #tpu.dot_dimension_numbers<[1], [0], [0], [1], [0, 0, 1, 1], [], []>} : vector<256x32xbf16>, vector<32x128xbf16>, vector<256x128xf32> -> vector<256x128xf32>
    %4 = vector.shape_cast %3 : vector<256x128xf32> to vector<16x16x128xf32>
    %5 = vector.extract_strided_slice %4 {offsets = [0, 0, 0], sizes = [16, 14, 8], strides = [1, 1, 1]} : vector<16x16x128xf32> to vector<16x14x8xf32>
    %6 = vector.extract_strided_slice %4 {offsets = [0, 1, 8], sizes = [16, 14, 8], strides = [1, 1, 1]} : vector<16x16x128xf32> to vector<16x14x8xf32>
    %7 = arith.addf %5, %6 : vector<16x14x8xf32>
    %8 = vector.extract_strided_slice %4 {offsets = [0, 2, 16], sizes = [16, 14, 8], strides = [1, 1, 1]} : vector<16x16x128xf32> to vector<16x14x8xf32>
    %9 = arith.addf %7, %8 : vector<16x14x8xf32>
    %cst_4 = arith.constant dense<0xFF800000> : vector<16x8xf32>
    %10 = vector.multi_reduction <maximumf>, %9, %cst_4 [1] : vector<16x14x8xf32> to vector<16x8xf32>
    %11 = vector.extract_strided_slice %4 {offsets = [0, 0, 24], sizes = [16, 13, 8], strides = [1, 1, 1]} : vector<16x16x128xf32> to vector<16x13x8xf32>
    %12 = vector.extract_strided_slice %4 {offsets = [0, 1, 32], sizes = [16, 13, 8], strides = [1, 1, 1]} : vector<16x16x128xf32> to vector<16x13x8xf32>
    %13 = arith.addf %11, %12 : vector<16x13x8xf32>
    %14 = vector.extract_strided_slice %4 {offsets = [0, 2, 40], sizes = [16, 13, 8], strides = [1, 1, 1]} : vector<16x16x128xf32> to vector<16x13x8xf32>
    %15 = arith.addf %13, %14 : vector<16x13x8xf32>
    %16 = vector.extract_strided_slice %4 {offsets = [0, 3, 48], sizes = [16, 13, 8], strides = [1, 1, 1]} : vector<16x16x128xf32> to vector<16x13x8xf32>
    %17 = arith.addf %15, %16 : vector<16x13x8xf32>
    %cst_5 = arith.constant dense<0xFF800000> : vector<16x8xf32>
    %18 = vector.multi_reduction <maximumf>, %17, %cst_5 [1] : vector<16x13x8xf32> to vector<16x8xf32>
    %19 = vector.extract_strided_slice %4 {offsets = [0, 0, 56], sizes = [16, 12, 8], strides = [1, 1, 1]} : vector<16x16x128xf32> to vector<16x12x8xf32>
    %20 = vector.extract_strided_slice %4 {offsets = [0, 1, 64], sizes = [16, 12, 8], strides = [1, 1, 1]} : vector<16x16x128xf32> to vector<16x12x8xf32>
    %21 = arith.addf %19, %20 : vector<16x12x8xf32>
    %22 = vector.extract_strided_slice %4 {offsets = [0, 2, 72], sizes = [16, 12, 8], strides = [1, 1, 1]} : vector<16x16x128xf32> to vector<16x12x8xf32>
    %23 = arith.addf %21, %22 : vector<16x12x8xf32>
    %24 = vector.extract_strided_slice %4 {offsets = [0, 3, 80], sizes = [16, 12, 8], strides = [1, 1, 1]} : vector<16x16x128xf32> to vector<16x12x8xf32>
    %25 = arith.addf %23, %24 : vector<16x12x8xf32>
    %26 = vector.extract_strided_slice %4 {offsets = [0, 4, 88], sizes = [16, 12, 8], strides = [1, 1, 1]} : vector<16x16x128xf32> to vector<16x12x8xf32>
    %27 = arith.addf %25, %26 : vector<16x12x8xf32>
    %cst_6 = arith.constant dense<0xFF800000> : vector<16x8xf32>
    %28 = vector.multi_reduction <maximumf>, %27, %cst_6 [1] : vector<16x12x8xf32> to vector<16x8xf32>
    %cst_7 = arith.constant 0.000000e+00 : f32
    %29 = vector.broadcast %cst_7 : f32 to vector<16x104xf32>
    %30 = tpu.concatenate %10, %18, %28, %29 in 1 : vector<16x8xf32>, vector<16x8xf32>, vector<16x8xf32>, vector<16x104xf32> -> vector<16x128xf32>
    %cst_8 = arith.constant 0.000000e+00 : f32
    %31 = vector.broadcast %cst_8 : f32 to vector<16x128xf32>
    %32 = arith.maximumf %30, %31 : vector<16x128xf32>
    %33 = arith.truncf %32 : vector<16x128xf32> to vector<16x128xbf16>
    %c0_9 = arith.constant 0 : index
    %c0_10 = arith.constant 0 : index
    %34 = vector.load %arg3[%c0_9, %c0_10] : memref<128x128xbf16, #tpu.memory_space<vmem>>, vector<128x128xbf16>
    %cst_11 = arith.constant dense<0.000000e+00> : vector<16x128xf32>
    %35 = tpu.matmul %33, %34, %cst_11 {dimension_numbers = #tpu.dot_dimension_numbers<[1], [0], [0], [1], [0, 0, 1, 1], [], []>} : vector<16x128xbf16>, vector<128x128xbf16>, vector<16x128xf32> -> vector<16x128xf32>
    %c0_12 = arith.constant 0 : index
    %c0_13 = arith.constant 0 : index
    %36 = vector.load %arg4[%c0_12, %c0_13] : memref<1x128xf32, #tpu.memory_space<vmem>>, vector<1x128xf32>
    %37 = vector.broadcast %36 : vector<1x128xf32> to vector<16x128xf32>
    %38 = arith.addf %35, %37 : vector<16x128xf32>
    %cst_14 = arith.constant 0.000000e+00 : f32
    %39 = vector.broadcast %cst_14 : f32 to vector<16x128xf32>
    %40 = arith.maximumf %38, %39 : vector<16x128xf32>
    %41 = arith.truncf %40 : vector<16x128xf32> to vector<16x128xbf16>
    %c0_15 = arith.constant 0 : index
    %c0_16 = arith.constant 0 : index
    %42 = vector.load %arg5[%c0_15, %c0_16] : memref<128x128xbf16, #tpu.memory_space<vmem>>, vector<128x128xbf16>
    %cst_17 = arith.constant dense<0.000000e+00> : vector<16x128xf32>
    %43 = tpu.matmul %41, %42, %cst_17 {dimension_numbers = #tpu.dot_dimension_numbers<[1], [0], [0], [1], [0, 0, 1, 1], [], []>} : vector<16x128xbf16>, vector<128x128xbf16>, vector<16x128xf32> -> vector<16x128xf32>
    %c0_18 = arith.constant 0 : index
    %c0_19 = arith.constant 0 : index
    %44 = vector.load %arg6[%c0_18, %c0_19] : memref<1x128xf32, #tpu.memory_space<vmem>>, vector<1x128xf32>
    %45 = vector.broadcast %44 : vector<1x128xf32> to vector<16x128xf32>
    %46 = arith.addf %43, %45 : vector<16x128xf32>
    %c0_20 = arith.constant 0 : index
    %c0_21 = arith.constant 0 : index
    %47 = vector.load %arg7[%c0_20, %c0_21] : memref<16x128xf32, #tpu.memory_space<vmem>>, vector<16x128xf32>
    tpu.vector_store %arg7[%c0_20, %c0_21], %46 {strides = array<i32>} : memref<16x128xf32, #tpu.memory_space<vmem>>, vector<16x128xf32>,
    return
  }
  func.func @transform_0(%arg0: i32) -> (i32, i32, i32) {
    %c0_i32 = arith.constant 0 : i32
    %c0_i32_0 = arith.constant 0 : i32
    %c0_i32_1 = arith.constant 0 : i32
    return %arg0, %c0_i32, %c0_i32_0 : i32, i32, i32
  }
  func.func @transform_1(%arg0: i32) -> (i32, i32) {
    %c0_i32 = arith.constant 0 : i32
    %c0_i32_0 = arith.constant 0 : i32
    %c0_i32_1 = arith.constant 0 : i32
    return %c0_i32, %c0_i32_0 : i32, i32
  }
  func.func @transform_2(%arg0: i32) -> (i32, i32) {
    %c0_i32 = arith.constant 0 : i32
    %c0_i32_0 = arith.constant 0 : i32
    %c0_i32_1 = arith.constant 0 : i32
    return %c0_i32, %c0_i32_0 : i32, i32
  }
  func.func @transform_3(%arg0: i32) -> (i32, i32) {
    %c0_i32 = arith.constant 0 : i32
    %c0_i32_0 = arith.constant 0 : i32
    %c0_i32_1 = arith.constant 0 : i32
    return %c0_i32, %c0_i32_0 : i32, i32
  }
  func.func @transform_4(%arg0: i32) -> (i32, i32) {
    %c0_i32 = arith.constant 0 : i32
    %c0_i32_0 = arith.constant 0 : i32
    %c0_i32_1 = arith.constant 0 : i32
    return %c0_i32, %c0_i32_0 : i32, i32
  }
  func.func @transform_5(%arg0: i32) -> (i32, i32) {
    %c0_i32 = arith.constant 0 : i32
    %c0_i32_0 = arith.constant 0 : i32
    %c0_i32_1 = arith.constant 0 : i32
    return %c0_i32, %c0_i32_0 : i32, i32
  }
  func.func @transform_6(%arg0: i32) -> (i32, i32) {
    %c0_i32 = arith.constant 0 : i32
    %c0_i32_0 = arith.constant 0 : i32
    return %arg0, %c0_i32 : i32, i32
  }
}

</mosaic_0001>

<llo_original>
// kernel: tpu_custom_call.1
$region0: #{tpu_custom_call.1}
  #allocation0 [shape = 'u32[]', space=smem, size = 0x4, offset = 0x4, fixed_abs, tag = 'smem constant byte address 0x4 - core index']
  #allocation1 [shape = 'u32[144,128]{1,0:T(1,128)}', space=vmem, size = 0x12000, scoped, tag = 'internal scratch']
  %s0 = inlined_call_operand.hbm [shape: bf16[16,16,32], index: 0, kind: input, shape index: {}]
  %s1 = inlined_call_operand.hbm [shape: bf16[32,128], index: 1, kind: input, shape index: {}]
  %s2 = inlined_call_operand.hbm [shape: bf16[128,128], index: 2, kind: input, shape index: {}]
  %s3 = inlined_call_operand.vmem [shape: f32[1,128], index: 3, kind: input, shape index: {}]
  %s4 = inlined_call_operand.hbm [shape: bf16[128,128], index: 4, kind: input, shape index: {}]
  %s5 = inlined_call_operand.vmem [shape: f32[1,128], index: 5, kind: input, shape index: {}]
  %s6 = inlined_call_operand.hbm [shape: f32[16,128], index: 6, kind: output, shape index: {}]
  %s7 = sld [smem:[#allocation0]]
  $region50: #{tpu_custom_call.1} parent=0
    _
  %s9 = ssub.s32 1, %s7
  %s10 = scalar_select 0, %s9, %s7
  $region1: #{tpu_custom_call.1} parent=0
    #allocation2 [shape = 'u8[65536]{0}', space=vmem, size = 0x10000, scoped, tag = 'input window, operand 0, single buffered']
    #allocation3 [shape = 's32[1]{0}', space=sflag, size = 0x4, scoped, tag = 'scoped memory for tpu_custom_call.1']
    #allocation4 [shape = 's32[1]{0}', space=sflag, size = 0x4, scoped, tag = 'scoped memory for tpu_custom_call.1']
    #allocation5 [shape = 'u8[8192]{0}', space=vmem, size = 0x2000, scoped, tag = 'input window, operand 1, single buffered']
    #allocation6 [shape = 's32[1]{0}', space=sflag, size = 0x4, scoped, tag = 'scoped memory for tpu_custom_call.1']
    #allocation7 [shape = 'u8[32768]{0}', space=vmem, size = 0x8000, scoped, tag = 'input window, operand 2, single buffered']
    #allocation8 [shape = 'u8[32768]{0}', space=vmem, size = 0x8000, scoped, tag = 'input window, operand 4, single buffered']
    #allocation9 [shape = 's32[1]{0}', space=sflag, size = 0x4, scoped, tag = 'scoped memory for tpu_custom_call.1']
    #allocation10 [shape = 'u8[8192]{0}', space=vmem, size = 0x2000, scoped, tag = 'output window, operand 0, single buffered']
    %11 = vsyncpa [#allocation3], 0
    %12 = vsyncpa [#allocation6], 0
    %13 = vsyncpa [#allocation9], 0
    %14 = vsyncpa [#allocation4], 0
    // Predicated region
    $region2: #{tpu_custom_call.1} parent=1 // pred_check
      _
    $region3: #{tpu_custom_call.1} parent=1 // pred_check_branch
      %16 = sbr.rel (0) target = $region5
    $region4: #{tpu_custom_call.1} parent=1 // pred_region
      %s18 = ssub.s32 2048, 2048
      %19 = vsyncadd [#allocation3], %s18
      %s20 = sshll.u32 [#allocation2], 4
      %s21 = int_to_ptr.vmem [resolvable:$true] %s20
      %26 = dma.hbm_to_vmem [thread:$0]  %s0, 2048, %s21, [#allocation3], 64, 64, 4
    $region5: #{tpu_custom_call.1} parent=1 // pred_fallthru
      _
    // Predicated region
    $region6: #{tpu_custom_call.1} parent=1 // pred_check
      _
    $region7: #{tpu_custom_call.1} parent=1 // pred_check_branch
      %28 = sbr.rel (0) target = $region9
    $region8: #{tpu_custom_call.1} parent=1 // pred_region
      %s30 = ssub.s32 256, 256
      %31 = vsyncadd [#allocation6], %s30
      %s32 = sshll.u32 [#allocation5], 4
      %s33 = int_to_ptr.vmem [resolvable:$true] %s32
      %38 = dma.hbm_to_vmem [thread:$0]  %s1, 256, %s33, [#allocation6], 64, 64, 4
    $region9: #{tpu_custom_call.1} parent=1 // pred_fallthru
      _
    // Predicated region
    $region10: #{tpu_custom_call.1} parent=1 // pred_check
      _
    $region11: #{tpu_custom_call.1} parent=1 // pred_check_branch
      %40 = sbr.rel (0) target = $region13
    $region12: #{tpu_custom_call.1} parent=1 // pred_region
      %s42 = ssub.s32 1024, 1024
      %43 = vsyncadd [#allocation6], %s42
      %s44 = sshll.u32 [#allocation7], 4
      %s45 = int_to_ptr.vmem [resolvable:$true] %s44
      %50 = dma.hbm_to_vmem [thread:$0]  %s2, 1024, %s45, [#allocation6], 64, 64, 4
    $region13: #{tpu_custom_call.1} parent=1 // pred_fallthru
      _
    // Predicated region
    $region14: #{tpu_custom_call.1} parent=1 // pred_check
      _
    $region15: #{tpu_custom_call.1} parent=1 // pred_check_branch
      %52 = sbr.rel (0) target = $region17
    $region16: #{tpu_custom_call.1} parent=1 // pred_region
      _
    $region17: #{tpu_custom_call.1} parent=1 // pred_fallthru
      _
    // Predicated region
    $region18: #{tpu_custom_call.1} parent=1 // pred_check
      _
    $region19: #{tpu_custom_call.1} parent=1 // pred_check_branch
      %54 = sbr.rel (0) target = $region21
    $region20: #{tpu_custom_call.1} parent=1 // pred_region
      %s56 = ssub.s32 1024, 1024
      %57 = vsyncadd [#allocation9], %s56
      %s58 = sshll.u32 [#allocation8], 4
      %s59 = int_to_ptr.vmem [resolvable:$true] %s58
      %64 = dma.hbm_to_vmem [thread:$0]  %s4, 1024, %s59, [#allocation9], 64, 64, 4
    $region21: #{tpu_custom_call.1} parent=1 // pred_fallthru
      _
    // Predicated region
    $region22: #{tpu_custom_call.1} parent=1 // pred_check
      _
    $region23: #{tpu_custom_call.1} parent=1 // pred_check_branch
      %66 = sbr.rel (0) target = $region25
    $region24: #{tpu_custom_call.1} parent=1 // pred_region
      _
    $region25: #{tpu_custom_call.1} parent=1 // pred_fallthru
      _
    // Predicated region
    $region26: #{tpu_custom_call.1} parent=1 // pred_check
      _
    $region27: #{tpu_custom_call.1} parent=1 // pred_check_branch
      %68 = sbr.rel (0) target = $region29
    $region28: #{tpu_custom_call.1} parent=1 // pred_region
      %69 = dma.done [#allocation3], 2048
    $region29: #{tpu_custom_call.1} parent=1 // pred_fallthru
      _
    // Predicated region
    $region30: #{tpu_custom_call.1} parent=1 // pred_check
      _
    $region31: #{tpu_custom_call.1} parent=1 // pred_check_branch
      %71 = sbr.rel (0) target = $region33
    $region32: #{tpu_custom_call.1} parent=1 // pred_region
      %72 = dma.done [#allocation6], 256
    $region33: #{tpu_custom_call.1} parent=1 // pred_fallthru
      _
    // Predicated region
    $region34: #{tpu_custom_call.1} parent=1 // pred_check
      _
    $region35: #{tpu_custom_call.1} parent=1 // pred_check_branch
      %74 = sbr.rel (0) target = $region37
    $region36: #{tpu_custom_call.1} parent=1 // pred_region
      %75 = dma.done [#allocation6], 1024
    $region37: #{tpu_custom_call.1} parent=1 // pred_fallthru
      _
    // Predicated region
    $region38: #{tpu_custom_call.1} parent=1 // pred_check
      _
    $region39: #{tpu_custom_call.1} parent=1 // pred_check_branch
      %77 = sbr.rel (0) target = $region41
    $region40: #{tpu_custom_call.1} parent=1 // pred_region
      %78 = dma.done [#allocation9], 1024
    $region41: #{tpu_custom_call.1} parent=1 // pred_fallthru
      _
    %v80 = vld [vmem:[#allocation2] sm:$0xf]
    %v81 = vld [vmem:[#allocation2 + $0x4] sm:$0xf]
    %v82 = vld [vmem:[#allocation2 + $0x8] sm:$0xf]
    %v83 = vld [vmem:[#allocation2 + $0xc] sm:$0xf]
    %v84 = vld [vmem:[#allocation2 + $0x10] sm:$0xf]
    %v85 = vld [vmem:[#allocation2 + $0x14] sm:$0xf]
    %v86 = vld [vmem:[#allocation2 + $0x18] sm:$0xf]
    %v87 = vld [vmem:[#allocation2 + $0x1c] sm:$0xf]
    %v88 = vld [vmem:[#allocation2 + $0x20] sm:$0xf]
    %v89 = vld [vmem:[#allocation2 + $0x24] sm:$0xf]
    %v90 = vld [vmem:[#allocation2 + $0x28] sm:$0xf]
    %v91 = vld [vmem:[#allocation2 + $0x2c] sm:$0xf]
    %v92 = vld [vmem:[#allocation2 + $0x30] sm:$0xf]
    %v93 = vld [vmem:[#allocation2 + $0x34] sm:$0xf]
    %v94 = vld [vmem:[#allocation2 + $0x38] sm:$0xf]
    %v95 = vld [vmem:[#allocation2 + $0x3c] sm:$0xf]
    %v96 = vld [vmem:[#allocation2 + $0x40] sm:$0xf]
    %v97 = vld [vmem:[#allocation2 + $0x44] sm:$0xf]
    %v98 = vld [vmem:[#allocation2 + $0x48] sm:$0xf]
    %v99 = vld [vmem:[#allocation2 + $0x4c] sm:$0xf]
    %v100 = vld [vmem:[#allocation2 + $0x50] sm:$0xf]
    %v101 = vld [vmem:[#allocation2 + $0x54] sm:$0xf]
    %v102 = vld [vmem:[#allocation2 + $0x58] sm:$0xf]
    %v103 = vld [vmem:[#allocation2 + $0x5c] sm:$0xf]
    %v104 = vld [vmem:[#allocation2 + $0x60] sm:$0xf]
    %v105 = vld [vmem:[#allocation2 + $0x64] sm:$0xf]
    %v106 = vld [vmem:[#allocation2 + $0x68] sm:$0xf]
    %v107 = vld [vmem:[#allocation2 + $0x6c] sm:$0xf]
    %v108 = vld [vmem:[#allocation2 + $0x70] sm:$0xf]
    %v109 = vld [vmem:[#allocation2 + $0x74] sm:$0xf]
    %v110 = vld [vmem:[#allocation2 + $0x78] sm:$0xf]
    %v111 = vld [vmem:[#allocation2 + $0x7c] sm:$0xf]
    %v112 = vld [vmem:[#allocation5] sm:$0xf]
    %v113 = vld [vmem:[#allocation5 + $0x4] sm:$0xf]
    %v114 = vld [vmem:[#allocation5 + $0x8] sm:$0xf]
    %v115 = vld [vmem:[#allocation5 + $0xc] sm:$0xf]
    %v148 = vunpack.c.l.b16 %v80
    %v149 = vunpack.c.l.b16 %v81
    %v150 = vunpack.c.l.b16 %v82
    %v151 = vunpack.c.l.b16 %v83
    %v152 = vunpack.c.l.b16 %v84
    %v153 = vunpack.c.l.b16 %v85
    %v154 = vunpack.c.l.b16 %v86
    %v155 = vunpack.c.l.b16 %v87
    %v156 = vunpack.c.l.b16 %v88
    %v157 = vunpack.c.l.b16 %v89
    %v158 = vunpack.c.l.b16 %v90
    %v159 = vunpack.c.l.b16 %v91
    %v160 = vunpack.c.l.b16 %v92
    %v161 = vunpack.c.l.b16 %v93
    %v162 = vunpack.c.l.b16 %v94
    %v163 = vunpack.c.l.b16 %v95
    %v164 = vunpack.c.l.b16 %v96
    %v165 = vunpack.c.l.b16 %v97
    %v166 = vunpack.c.l.b16 %v98
    %v167 = vunpack.c.l.b16 %v99
    %v168 = vunpack.c.l.b16 %v100
    %v169 = vunpack.c.l.b16 %v101
    %v170 = vunpack.c.l.b16 %v102
    %v171 = vunpack.c.l.b16 %v103
    %v172 = vunpack.c.l.b16 %v104
    %v173 = vunpack.c.l.b16 %v105
    %v174 = vunpack.c.l.b16 %v106
    %v175 = vunpack.c.l.b16 %v107
    %v176 = vunpack.c.l.b16 %v108
    %v177 = vunpack.c.l.b16 %v109
    %v178 = vunpack.c.l.b16 %v110
    %v179 = vunpack.c.l.b16 %v111
    %v180 = vpack.c.b16 %v149, %v148
    %v181 = vpack.c.b16 %v151, %v150
    %v182 = vpack.c.b16 %v153, %v152
    %v183 = vpack.c.b16 %v155, %v154
    %v184 = vpack.c.b16 %v157, %v156
    %v185 = vpack.c.b16 %v159, %v158
    %v186 = vpack.c.b16 %v161, %v160
    %v187 = vpack.c.b16 %v163, %v162
    %v188 = vpack.c.b16 %v165, %v164
    %v189 = vpack.c.b16 %v167, %v166
    %v190 = vpack.c.b16 %v169, %v168
    %v191 = vpack.c.b16 %v171, %v170
    %v192 = vpack.c.b16 %v173, %v172
    %v193 = vpack.c.b16 %v175, %v174
    %v194 = vpack.c.b16 %v177, %v176
    %v195 = vpack.c.b16 %v179, %v178
    %v200 = vunpack.c.l.b16 %v112
    %v201 = vunpack.c.l.b16 %v113
    %v202 = vunpack.c.l.b16 %v114
    %v203 = vunpack.c.l.b16 %v115
    %v204 = vpack.c.b16 %v201, %v200
    %v205 = vpack.c.b16 %v203, %v202
    %vm208 = vcmask 261120
    %v210 = vsel %vm208, %v180, 0
    %v213 = vsel %vm208, %v181, 0
    %v216 = vsel %vm208, %v182, 0
    %v219 = vsel %vm208, %v183, 0
    %v222 = vsel %vm208, %v184, 0
    %v225 = vsel %vm208, %v185, 0
    %v228 = vsel %vm208, %v186, 0
    %v231 = vsel %vm208, %v187, 0
    %v234 = vsel %vm208, %v188, 0
    %v237 = vsel %vm208, %v189, 0
    %v240 = vsel %vm208, %v190, 0
    %v243 = vsel %vm208, %v191, 0
    %v246 = vsel %vm208, %v192, 0
    %v249 = vsel %vm208, %v193, 0
    %v252 = vsel %vm208, %v194, 0
    %v255 = vsel %vm208, %v195, 0
    %257 = vmatprep.subr.bf16.mxu0 0
    %258 = vmatpush1.bf16.msra.mxu0 %v204
    %259 = vmatprep.subr.bf16.mxu0 0
    %260 = vmatpush1.bf16.msra.mxu0 %v205
    %261 = vmatprep.subr.bf16.mxu0 0
    %262 = vmatpush1.bf16.msra.mxu0 0
    %263 = vmatprep.subr.bf16.mxu0 0
    %264 = vmatpush1.bf16.msra.mxu0 0
    %265 = vmatprep.subr.bf16.mxu0 0
    %266 = vmatpush1.bf16.msra.mxu0 0
    %267 = vmatprep.subr.bf16.mxu0 0
    %268 = vmatpush1.bf16.msra.mxu0 0
    %269 = vmatprep.subr.bf16.mxu0 0
    %270 = vmatpush1.bf16.msra.mxu0 0
    %271 = vmatprep.subr.bf16.mxu0 0
    %272 = vmatpush1.bf16.msra.mxu0 0
    %273 = vmatprep.subr.bf16.mxu0 0
    %274 = vmatpush1.bf16.msra.mxu0 0
    %275 = vmatprep.subr.bf16.mxu0 0
    %276 = vmatpush1.bf16.msra.mxu0 0
    %277 = vmatprep.subr.bf16.mxu0 0
    %278 = vmatpush1.bf16.msra.mxu0 0
    %279 = vmatprep.subr.bf16.mxu0 0
    %280 = vmatpush1.bf16.msra.mxu0 0
    %281 = vmatprep.subr.bf16.mxu0 0
    %282 = vmatpush1.bf16.msra.mxu0 0
    %283 = vmatprep.subr.bf16.mxu0 0
    %284 = vmatpush1.bf16.msra.mxu0 0
    %285 = vmatprep.subr.bf16.mxu0 0
    %286 = vmatpush1.bf16.msra.mxu0 0
    %287 = vmatprep.subr.bf16.mxu0 0
    %288 = vmatpush1.bf16.msra.mxu0 0
    %289 = vmatprep.mubr.bf16.mxu0 0
    %290 = vmatmul.mubr.bf16.gmra.mrb[0].mxu0 %v210
    %v291 = vpop.f32.mrb[0].mxu0
    %v292 = vadd.f32 0.0, %v291
    %v293 = vpop.f32.mrb[0].mxu0
    %v294 = vpop.f32.mrb[0].mxu0
    %v295 = vadd.f32 0.0, %v294
    %v296 = vpop.f32.mrb[0].mxu0
    %297 = vmatprep.mubr.bf16.mxu0 0
    %298 = vmatmul.mubr.bf16.gmra.mrb[0].mxu0 %v213
    %v299 = vpop.f32.mrb[0].mxu0
    %v300 = vadd.f32 0.0, %v299
    %v301 = vpop.f32.mrb[0].mxu0
    %v302 = vpop.f32.mrb[0].mxu0
    %v303 = vadd.f32 0.0, %v302
    %v304 = vpop.f32.mrb[0].mxu0
    %305 = vmatprep.mubr.bf16.mxu0 0
    %306 = vmatmul.mubr.bf16.gmra.mrb[0].mxu0 %v216
    %v307 = vpop.f32.mrb[0].mxu0
    %v308 = vadd.f32 0.0, %v307
    %v309 = vpop.f32.mrb[0].mxu0
    %v310 = vpop.f32.mrb[0].mxu0
    %v311 = vadd.f32 0.0, %v310
    %v312 = vpop.f32.mrb[0].mxu0
    %313 = vmatprep.mubr.bf16.mxu0 0
    %314 = vmatmul.mubr.bf16.gmra.mrb[0].mxu0 %v219
    %v315 = vpop.f32.mrb[0].mxu0
    %v316 = vadd.f32 0.0, %v315
    %v317 = vpop.f32.mrb[0].mxu0
    %v318 = vpop.f32.mrb[0].mxu0
    %v319 = vadd.f32 0.0, %v318
    %v320 = vpop.f32.mrb[0].mxu0
    %321 = vmatprep.mubr.bf16.mxu0 0
    %322 = vmatmul.mubr.bf16.gmra.mrb[0].mxu0 %v222
    %v323 = vpop.f32.mrb[0].mxu0
    %v324 = vadd.f32 0.0, %v323
    %v325 = vpop.f32.mrb[0].mxu0
    %v326 = vpop.f32.mrb[0].mxu0
    %v327 = vadd.f32 0.0, %v326
    %v328 = vpop.f32.mrb[0].mxu0
    %329 = vmatprep.mubr.bf16.mxu0 0
    %330 = vmatmul.mubr.bf16.gmra.mrb[0].mxu0 %v225
    %v331 = vpop.f32.mrb[0].mxu0
    %v332 = vadd.f32 0.0, %v331
    %v333 = vpop.f32.mrb[0].mxu0
    %v334 = vpop.f32.mrb[0].mxu0
    %v335 = vadd.f32 0.0, %v334
    %v336 = vpop.f32.mrb[0].mxu0
    %337 = vmatprep.mubr.bf16.mxu0 0
    %338 = vmatmul.mubr.bf16.gmra.mrb[0].mxu0 %v228
    %v339 = vpop.f32.mrb[0].mxu0
    %v340 = vadd.f32 0.0, %v339
    %v341 = vpop.f32.mrb[0].mxu0
    %v342 = vpop.f32.mrb[0].mxu0
    %v343 = vadd.f32 0.0, %v342
    %v344 = vpop.f32.mrb[0].mxu0
    %345 = vmatprep.mubr.bf16.mxu0 0
    %346 = vmatmul.mubr.bf16.gmra.mrb[0].mxu0 %v231
    %v347 = vpop.f32.mrb[0].mxu0
    %v348 = vadd.f32 0.0, %v347
    %v349 = vpop.f32.mrb[0].mxu0
    %v350 = vpop.f32.mrb[0].mxu0
    %v351 = vadd.f32 0.0, %v350
    %v352 = vpop.f32.mrb[0].mxu0
    %353 = vmatprep.mubr.bf16.mxu0 0
    %354 = vmatmul.mubr.bf16.gmra.mrb[0].mxu0 %v234
    %v355 = vpop.f32.mrb[0].mxu0
    %v356 = vadd.f32 0.0, %v355
    %v357 = vpop.f32.mrb[0].mxu0
    %v358 = vpop.f32.mrb[0].mxu0
    %v359 = vadd.f32 0.0, %v358
    %v360 = vpop.f32.mrb[0].mxu0
    %361 = vmatprep.mubr.bf16.mxu0 0
    %362 = vmatmul.mubr.bf16.gmra.mrb[0].mxu0 %v237
    %v363 = vpop.f32.mrb[0].mxu0
    %v364 = vadd.f32 0.0, %v363
    %v365 = vpop.f32.mrb[0].mxu0
    %v366 = vpop.f32.mrb[0].mxu0
    %v367 = vadd.f32 0.0, %v366
    %v368 = vpop.f32.mrb[0].mxu0
    %369 = vmatprep.mubr.bf16.mxu0 0
    %370 = vmatmul.mubr.bf16.gmra.mrb[0].mxu0 %v240
    %v371 = vpop.f32.mrb[0].mxu0
    %v372 = vadd.f32 0.0, %v371
    %v373 = vpop.f32.mrb[0].mxu0
    %v374 = vpop.f32.mrb[0].mxu0
    %v375 = vadd.f32 0.0, %v374
    %v376 = vpop.f32.mrb[0].mxu0
    %377 = vmatprep.mubr.bf16.mxu0 0
    %378 = vmatmul.mubr.bf16.gmra.mrb[0].mxu0 %v243
    %v379 = vpop.f32.mrb[0].mxu0
    %v380 = vadd.f32 0.0, %v379
    %v381 = vpop.f32.mrb[0].mxu0
    %v382 = vpop.f32.mrb[0].mxu0
    %v383 = vadd.f32 0.0, %v382
    %v384 = vpop.f32.mrb[0].mxu0
    %385 = vmatprep.mubr.bf16.mxu0 0
    %386 = vmatmul.mubr.bf16.gmra.mrb[0].mxu0 %v246
    %v387 = vpop.f32.mrb[0].mxu0
    %v388 = vadd.f32 0.0, %v387
    %v389 = vpop.f32.mrb[0].mxu0
    %v390 = vpop.f32.mrb[0].mxu0
    %v391 = vadd.f32 0.0, %v390
    %v392 = vpop.f32.mrb[0].mxu0
    %393 = vmatprep.mubr.bf16.mxu0 0
    %394 = vmatmul.mubr.bf16.gmra.mrb[0].mxu0 %v249
    %v395 = vpop.f32.mrb[0].mxu0
    %v396 = vadd.f32 0.0, %v395
    %v397 = vpop.f32.mrb[0].mxu0
    %v398 = vpop.f32.mrb[0].mxu0
    %v399 = vadd.f32 0.0, %v398
    %v400 = vpop.f32.mrb[0].mxu0
    %401 = vmatprep.mubr.bf16.mxu0 0
    %402 = vmatmul.mubr.bf16.gmra.mrb[0].mxu0 %v252
    %v403 = vpop.f32.mrb[0].mxu0
    %v404 = vadd.f32 0.0, %v403
    %v405 = vpop.f32.mrb[0].mxu0
    %v406 = vpop.f32.mrb[0].mxu0
    %v407 = vadd.f32 0.0, %v406
    %v408 = vpop.f32.mrb[0].mxu0
    %409 = vmatprep.mubr.bf16.mxu0 0
    %410 = vmatmul.mubr.bf16.gmra.mrb[0].mxu0 %v255
    %v411 = vpop.f32.mrb[0].mxu0
    %v412 = vadd.f32 0.0, %v411
    %v413 = vpop.f32.mrb[0].mxu0
    %v414 = vpop.f32.mrb[0].mxu0
    %v415 = vadd.f32 0.0, %v414
    %v416 = vpop.f32.mrb[0].mxu0
    %417 = vdwg.mxu0
    %vm450 = vcmask 1046528
    %v451 = vrot.slane %v292, 1
    %v452 = vrot.slane %v295, 1
    %v453 = vsel %vm450, %v451, %v452
    %v454 = vrot.slane %v300, 1
    %v455 = vrot.slane %v303, 1
    %v456 = vsel %vm450, %v454, %v455
    %v457 = vrot.slane %v308, 1
    %v458 = vrot.slane %v311, 1
    %v459 = vsel %vm450, %v457, %v458
    %v460 = vrot.slane %v316, 1
    %v461 = vrot.slane %v319, 1
    %v462 = vsel %vm450, %v460, %v461
    %v463 = vrot.slane %v324, 1
    %v464 = vrot.slane %v327, 1
    %v465 = vsel %vm450, %v463, %v464
    %v466 = vrot.slane %v332, 1
    %v467 = vrot.slane %v335, 1
    %v468 = vsel %vm450, %v466, %v467
    %v469 = vrot.slane %v340, 1
    %v470 = vrot.slane %v343, 1
    %v471 = vsel %vm450, %v469, %v470
    %v472 = vrot.slane %v348, 1
    %v473 = vrot.slane %v351, 1
    %v474 = vsel %vm450, %v472, %v473
    %v475 = vrot.slane %v356, 1
    %v476 = vrot.slane %v359, 1
    %v477 = vsel %vm450, %v475, %v476
    %v478 = vrot.slane %v364, 1
    %v479 = vrot.slane %v367, 1
    %v480 = vsel %vm450, %v478, %v479
    %v481 = vrot.slane %v372, 1
    %v482 = vrot.slane %v375, 1
    %v483 = vsel %vm450, %v481, %v482
    %v484 = vrot.slane %v380, 1
    %v485 = vrot.slane %v383, 1
    %v486 = vsel %vm450, %v484, %v485
    %v487 = vrot.slane %v388, 1
    %v488 = vrot.slane %v391, 1
    %v489 = vsel %vm450, %v487, %v488
    %v490 = vrot.slane %v396, 1
    %v491 = vrot.slane %v399, 1
    %v492 = vsel %vm450, %v490, %v491
    %v493 = vrot.slane %v404, 1
    %v494 = vrot.slane %v407, 1
    %v495 = vsel %vm450, %v493, %v494
    %v496 = vrot.slane %v412, 1
    %v497 = vrot.slane %v415, 1
    %v498 = vsel %vm450, %v496, %v497
    %499 = vrot.lane.b32.xlu0 %v453, 120
    %v500 = vpop.permute.xlu0 %499
    %501 = vrot.lane.b32.xlu0 %v452, 120
    %v502 = vpop.permute.xlu0 %501
    %503 = vrot.lane.b32.xlu0 %v456, 120
    %v504 = vpop.permute.xlu0 %503
    %505 = vrot.lane.b32.xlu0 %v455, 120
    %v506 = vpop.permute.xlu0 %505
    %507 = vrot.lane.b32.xlu0 %v459, 120
    %v508 = vpop.permute.xlu0 %507
    %509 = vrot.lane.b32.xlu0 %v458, 120
    %v510 = vpop.permute.xlu0 %509
    %511 = vrot.lane.b32.xlu0 %v462, 120
    %v512 = vpop.permute.xlu0 %511
    %513 = vrot.lane.b32.xlu0 %v461, 120
    %v514 = vpop.permute.xlu0 %513
    %515 = vrot.lane.b32.xlu0 %v465, 120
    %v516 = vpop.permute.xlu0 %515
    %517 = vrot.lane.b32.xlu0 %v464, 120
    %v518 = vpop.permute.xlu0 %517
    %519 = vrot.lane.b32.xlu0 %v468, 120
    %v520 = vpop.permute.xlu0 %519
    %521 = vrot.lane.b32.xlu0 %v467, 120
    %v522 = vpop.permute.xlu0 %521
    %523 = vrot.lane.b32.xlu0 %v471, 120
    %v524 = vpop.permute.xlu0 %523
    %525 = vrot.lane.b32.xlu0 %v470, 120
    %v526 = vpop.permute.xlu0 %525
    %527 = vrot.lane.b32.xlu0 %v474, 120
    %v528 = vpop.permute.xlu0 %527
    %529 = vrot.lane.b32.xlu0 %v473, 120
    %v530 = vpop.permute.xlu0 %529
    %531 = vrot.lane.b32.xlu0 %v477, 120
    %v532 = vpop.permute.xlu0 %531
    %533 = vrot.lane.b32.xlu0 %v476, 120
    %v534 = vpop.permute.xlu0 %533
    %535 = vrot.lane.b32.xlu0 %v480, 120
    %v536 = vpop.permute.xlu0 %535
    %537 = vrot.lane.b32.xlu0 %v479, 120
    %v538 = vpop.permute.xlu0 %537
    %539 = vrot.lane.b32.xlu0 %v483, 120
    %v540 = vpop.permute.xlu0 %539
    %541 = vrot.lane.b32.xlu0 %v482, 120
    %v542 = vpop.permute.xlu0 %541
    %543 = vrot.lane.b32.xlu0 %v486, 120
    %v544 = vpop.permute.xlu0 %543
    %545 = vrot.lane.b32.xlu0 %v485, 120
    %v546 = vpop.permute.xlu0 %545
    %547 = vrot.lane.b32.xlu0 %v489, 120
    %v548 = vpop.permute.xlu0 %547
    %549 = vrot.lane.b32.xlu0 %v488, 120
    %v550 = vpop.permute.xlu0 %549
    %551 = vrot.lane.b32.xlu0 %v492, 120
    %v552 = vpop.permute.xlu0 %551
    %553 = vrot.lane.b32.xlu0 %v491, 120
    %v554 = vpop.permute.xlu0 %553
    %555 = vrot.lane.b32.xlu0 %v495, 120
    %v556 = vpop.permute.xlu0 %555
    %557 = vrot.lane.b32.xlu0 %v494, 120
    %v558 = vpop.permute.xlu0 %557
    %559 = vrot.lane.b32.xlu0 %v498, 120
    %v560 = vpop.permute.xlu0 %559
    %561 = vrot.lane.b32.xlu0 %v497, 120
    %v562 = vpop.permute.xlu0 %561
    %v595 = vadd.f32 %v292, %v500
    %v596 = vadd.f32 %v295, %v502
    %v597 = vadd.f32 %v300, %v504
    %v598 = vadd.f32 %v303, %v506
    %v599 = vadd.f32 %v308, %v508
    %v600 = vadd.f32 %v311, %v510
    %v601 = vadd.f32 %v316, %v512
    %v602 = vadd.f32 %v319, %v514
    %v603 = vadd.f32 %v324, %v516
    %v604 = vadd.f32 %v327, %v518
    %v605 = vadd.f32 %v332, %v520
    %v606 = vadd.f32 %v335, %v522
    %v607 = vadd.f32 %v340, %v524
    %v608 = vadd.f32 %v343, %v526
    %v609 = vadd.f32 %v348, %v528
    %v610 = vadd.f32 %v351, %v530
    %v611 = vadd.f32 %v356, %v532
    %v612 = vadd.f32 %v359, %v534
    %v613 = vadd.f32 %v364, %v536
    %v614 = vadd.f32 %v367, %v538
    %v615 = vadd.f32 %v372, %v540
    %v616 = vadd.f32 %v375, %v542
    %v617 = vadd.f32 %v380, %v544
    %v618 = vadd.f32 %v383, %v546
    %v619 = vadd.f32 %v388, %v548
    %v620 = vadd.f32 %v391, %v550
    %v621 = vadd.f32 %v396, %v552
    %v622 = vadd.f32 %v399, %v554
    %v623 = vadd.f32 %v404, %v556
    %v624 = vadd.f32 %v407, %v558
    %v625 = vadd.f32 %v412, %v560
    %v626 = vadd.f32 %v415, %v562
    %vm627 = vcmask 1045504
    %v628 = vrot.slane %v292, 2
    %v629 = vrot.slane %v295, 2
    %v630 = vsel %vm627, %v628, %v629
    %v631 = vrot.slane %v300, 2
    %v632 = vrot.slane %v303, 2
    %v633 = vsel %vm627, %v631, %v632
    %v634 = vrot.slane %v308, 2
    %v635 = vrot.slane %v311, 2
    %v636 = vsel %vm627, %v634, %v635
    %v637 = vrot.slane %v316, 2
    %v638 = vrot.slane %v319, 2
    %v639 = vsel %vm627, %v637, %v638
    %v640 = vrot.slane %v324, 2
    %v641 = vrot.slane %v327, 2
    %v642 = vsel %vm627, %v640, %v641
    %v643 = vrot.slane %v332, 2
    %v644 = vrot.slane %v335, 2
    %v645 = vsel %vm627, %v643, %v644
    %v646 = vrot.slane %v340, 2
    %v647 = vrot.slane %v343, 2
    %v648 = vsel %vm627, %v646, %v647
    %v649 = vrot.slane %v348, 2
    %v650 = vrot.slane %v351, 2
    %v651 = vsel %vm627, %v649, %v650
    %v652 = vrot.slane %v356, 2
    %v653 = vrot.slane %v359, 2
    %v654 = vsel %vm627, %v652, %v653
    %v655 = vrot.slane %v364, 2
    %v656 = vrot.slane %v367, 2
    %v657 = vsel %vm627, %v655, %v656
    %v658 = vrot.slane %v372, 2
    %v659 = vrot.slane %v375, 2
    %v660 = vsel %vm627, %v658, %v659
    %v661 = vrot.slane %v380, 2
    %v662 = vrot.slane %v383, 2
    %v663 = vsel %vm627, %v661, %v662
    %v664 = vrot.slane %v388, 2
    %v665 = vrot.slane %v391, 2
    %v666 = vsel %vm627, %v664, %v665
    %v667 = vrot.slane %v396, 2
    %v668 = vrot.slane %v399, 2
    %v669 = vsel %vm627, %v667, %v668
    %v670 = vrot.slane %v404, 2
    %v671 = vrot.slane %v407, 2
    %v672 = vsel %vm627, %v670, %v671
    %v673 = vrot.slane %v412, 2
    %v674 = vrot.slane %v415, 2
    %v675 = vsel %vm627, %v673, %v674
    %676 = vrot.lane.b32.xlu0 %v630, 112
    %v677 = vpop.permute.xlu0 %676
    %678 = vrot.lane.b32.xlu0 %v629, 112
    %v679 = vpop.permute.xlu0 %678
    %680 = vrot.lane.b32.xlu0 %v633, 112
    %v681 = vpop.permute.xlu0 %680
    %682 = vrot.lane.b32.xlu0 %v632, 112
    %v683 = vpop.permute.xlu0 %682
    %684 = vrot.lane.b32.xlu0 %v636, 112
    %v685 = vpop.permute.xlu0 %684
    %686 = vrot.lane.b32.xlu0 %v635, 112
    %v687 = vpop.permute.xlu0 %686
    %688 = vrot.lane.b32.xlu0 %v639, 112
    %v689 = vpop.permute.xlu0 %688
    %690 = vrot.lane.b32.xlu0 %v638, 112
    %v691 = vpop.permute.xlu0 %690
    %692 = vrot.lane.b32.xlu0 %v642, 112
    %v693 = vpop.permute.xlu0 %692
    %694 = vrot.lane.b32.xlu0 %v641, 112
    %v695 = vpop.permute.xlu0 %694
    %696 = vrot.lane.b32.xlu0 %v645, 112
    %v697 = vpop.permute.xlu0 %696
    %698 = vrot.lane.b32.xlu0 %v644, 112
    %v699 = vpop.permute.xlu0 %698
    %700 = vrot.lane.b32.xlu0 %v648, 112
    %v701 = vpop.permute.xlu0 %700
    %702 = vrot.lane.b32.xlu0 %v647, 112
    %v703 = vpop.permute.xlu0 %702
    %704 = vrot.lane.b32.xlu0 %v651, 112
    %v705 = vpop.permute.xlu0 %704
    %706 = vrot.lane.b32.xlu0 %v650, 112
    %v707 = vpop.permute.xlu0 %706
    %708 = vrot.lane.b32.xlu0 %v654, 112
    %v709 = vpop.permute.xlu0 %708
    %710 = vrot.lane.b32.xlu0 %v653, 112
    %v711 = vpop.permute.xlu0 %710
    %712 = vrot.lane.b32.xlu0 %v657, 112
    %v713 = vpop.permute.xlu0 %712
    %714 = vrot.lane.b32.xlu0 %v656, 112
    %v715 = vpop.permute.xlu0 %714
    %716 = vrot.lane.b32.xlu0 %v660, 112
    %v717 = vpop.permute.xlu0 %716
    %718 = vrot.lane.b32.xlu0 %v659, 112
    %v719 = vpop.permute.xlu0 %718
    %720 = vrot.lane.b32.xlu0 %v663, 112
    %v721 = vpop.permute.xlu0 %720
    %722 = vrot.lane.b32.xlu0 %v662, 112
    %v723 = vpop.permute.xlu0 %722
    %724 = vrot.lane.b32.xlu0 %v666, 112
    %v725 = vpop.permute.xlu0 %724
    %726 = vrot.lane.b32.xlu0 %v665, 112
    %v727 = vpop.permute.xlu0 %726
    %728 = vrot.lane.b32.xlu0 %v669, 112
    %v729 = vpop.permute.xlu0 %728
    %730 = vrot.lane.b32.xlu0 %v668, 112
    %v731 = vpop.permute.xlu0 %730
    %732 = vrot.lane.b32.xlu0 %v672, 112
    %v733 = vpop.permute.xlu0 %732
    %734 = vrot.lane.b32.xlu0 %v671, 112
    %v735 = vpop.permute.xlu0 %734
    %736 = vrot.lane.b32.xlu0 %v675, 112
    %v737 = vpop.permute.xlu0 %736
    %738 = vrot.lane.b32.xlu0 %v674, 112
    %v739 = vpop.permute.xlu0 %738
    %v772 = vadd.f32 %v595, %v677
    %v773 = vadd.f32 %v596, %v679
    %v774 = vadd.f32 %v597, %v681
    %v775 = vadd.f32 %v598, %v683
    %v776 = vadd.f32 %v599, %v685
    %v777 = vadd.f32 %v600, %v687
    %v778 = vadd.f32 %v601, %v689
    %v779 = vadd.f32 %v602, %v691
    %v780 = vadd.f32 %v603, %v693
    %v781 = vadd.f32 %v604, %v695
    %v782 = vadd.f32 %v605, %v697
    %v783 = vadd.f32 %v606, %v699
    %v784 = vadd.f32 %v607, %v701
    %v785 = vadd.f32 %v608, %v703
    %v786 = vadd.f32 %v609, %v705
    %v787 = vadd.f32 %v610, %v707
    %v788 = vadd.f32 %v611, %v709
    %v789 = vadd.f32 %v612, %v711
    %v790 = vadd.f32 %v613, %v713
    %v791 = vadd.f32 %v614, %v715
    %v792 = vadd.f32 %v615, %v717
    %v793 = vadd.f32 %v616, %v719
    %v794 = vadd.f32 %v617, %v721
    %v795 = vadd.f32 %v618, %v723
    %v796 = vadd.f32 %v619, %v725
    %v797 = vadd.f32 %v620, %v727
    %v798 = vadd.f32 %v621, %v729
    %v799 = vadd.f32 %v622, %v731
    %v800 = vadd.f32 %v623, %v733
    %v801 = vadd.f32 %v624, %v735
    %v802 = vadd.f32 %v625, %v737
    %v803 = vadd.f32 %v626, %v739
    %vm804 = vcmask 64512
    %v805 = vsel %vm804, %v772, -inf
    %vm806 = vcmask 62464
    %v807 = vsel %vm806, %v773, -inf
    %v808 = vmax.f32 %v805, %v807
    %v809 = vrot.slane %v808, 4
    %v810 = vmax.f32 %v808, %v809
    %v811 = vrot.slane %v810, 2
    %v812 = vmax.f32 %v810, %v811
    %v813 = vrot.slane %v812, 1
    %v814 = vmax.f32 %v812, %v813
    %v815 = vsel %vm804, %v774, -inf
    %v816 = vsel %vm806, %v775, -inf
    %v817 = vmax.f32 %v815, %v816
    %v818 = vrot.slane %v817, 4
    %v819 = vmax.f32 %v817, %v818
    %v820 = vrot.slane %v819, 2
    %v821 = vmax.f32 %v819, %v820
    %v822 = vrot.slane %v821, 1
    %v823 = vmax.f32 %v821, %v822
    %v824 = vsel %vm804, %v776, -inf
    %v825 = vsel %vm806, %v777, -inf
    %v826 = vmax.f32 %v824, %v825
    %v827 = vrot.slane %v826, 4
    %v828 = vmax.f32 %v826, %v827
    %v829 = vrot.slane %v828, 2
    %v830 = vmax.f32 %v828, %v829
    %v831 = vrot.slane %v830, 1
    %v832 = vmax.f32 %v830, %v831
    %v833 = vsel %vm804, %v778, -inf
    %v834 = vsel %vm806, %v779, -inf
    %v835 = vmax.f32 %v833, %v834
    %v836 = vrot.slane %v835, 4
    %v837 = vmax.f32 %v835, %v836
    %v838 = vrot.slane %v837, 2
    %v839 = vmax.f32 %v837, %v838
    %v840 = vrot.slane %v839, 1
    %v841 = vmax.f32 %v839, %v840
    %v842 = vsel %vm804, %v780, -inf
    %v843 = vsel %vm806, %v781, -inf
    %v844 = vmax.f32 %v842, %v843
    %v845 = vrot.slane %v844, 4
    %v846 = vmax.f32 %v844, %v845
    %v847 = vrot.slane %v846, 2
    %v848 = vmax.f32 %v846, %v847
    %v849 = vrot.slane %v848, 1
    %v850 = vmax.f32 %v848, %v849
    %v851 = vsel %vm804, %v782, -inf
    %v852 = vsel %vm806, %v783, -inf
    %v853 = vmax.f32 %v851, %v852
    %v854 = vrot.slane %v853, 4
    %v855 = vmax.f32 %v853, %v854
    %v856 = vrot.slane %v855, 2
    %v857 = vmax.f32 %v855, %v856
    %v858 = vrot.slane %v857, 1
    %v859 = vmax.f32 %v857, %v858
    %v860 = vsel %vm804, %v784, -inf
    %v861 = vsel %vm806, %v785, -inf
    %v862 = vmax.f32 %v860, %v861
    %v863 = vrot.slane %v862, 4
    %v864 = vmax.f32 %v862, %v863
    %v865 = vrot.slane %v864, 2
    %v866 = vmax.f32 %v864, %v865
    %v867 = vrot.slane %v866, 1
    %v868 = vmax.f32 %v866, %v867
    %v869 = vsel %vm804, %v786, -inf
    %v870 = vsel %vm806, %v787, -inf
    %v871 = vmax.f32 %v869, %v870
    %v872 = vrot.slane %v871, 4
    %v873 = vmax.f32 %v871, %v872
    %v874 = vrot.slane %v873, 2
    %v875 = vmax.f32 %v873, %v874
    %v876 = vrot.slane %v875, 1
    %v877 = vmax.f32 %v875, %v876
    %v878 = vsel %vm804, %v788, -inf
    %v879 = vsel %vm806, %v789, -inf
    %v880 = vmax.f32 %v878, %v879
    %v881 = vrot.slane %v880, 4
    %v882 = vmax.f32 %v880, %v881
    %v883 = vrot.slane %v882, 2
    %v884 = vmax.f32 %v882, %v883
    %v885 = vrot.slane %v884, 1
    %v886 = vmax.f32 %v884, %v885
    %v887 = vsel %vm804, %v790, -inf
    %v888 = vsel %vm806, %v791, -inf
    %v889 = vmax.f32 %v887, %v888
    %v890 = vrot.slane %v889, 4
    %v891 = vmax.f32 %v889, %v890
    %v892 = vrot.slane %v891, 2
    %v893 = vmax.f32 %v891, %v892
    %v894 = vrot.slane %v893, 1
    %v895 = vmax.f32 %v893, %v894
    %v896 = vsel %vm804, %v792, -inf
    %v897 = vsel %vm806, %v793, -inf
    %v898 = vmax.f32 %v896, %v897
    %v899 = vrot.slane %v898, 4
    %v900 = vmax.f32 %v898, %v899
    %v901 = vrot.slane %v900, 2
    %v902 = vmax.f32 %v900, %v901
    %v903 = vrot.slane %v902, 1
    %v904 = vmax.f32 %v902, %v903
    %v905 = vsel %vm804, %v794, -inf
    %v906 = vsel %vm806, %v795, -inf
    %v907 = vmax.f32 %v905, %v906
    %v908 = vrot.slane %v907, 4
    %v909 = vmax.f32 %v907, %v908
    %v910 = vrot.slane %v909, 2
    %v911 = vmax.f32 %v909, %v910
    %v912 = vrot.slane %v911, 1
    %v913 = vmax.f32 %v911, %v912
    %v914 = vsel %vm804, %v796, -inf
    %v915 = vsel %vm806, %v797, -inf
    %v916 = vmax.f32 %v914, %v915
    %v917 = vrot.slane %v916, 4
    %v918 = vmax.f32 %v916, %v917
    %v919 = vrot.slane %v918, 2
    %v920 = vmax.f32 %v918, %v919
    %v921 = vrot.slane %v920, 1
    %v922 = vmax.f32 %v920, %v921
    %v923 = vsel %vm804, %v798, -inf
    %v924 = vsel %vm806, %v799, -inf
    %v925 = vmax.f32 %v923, %v924
    %v926 = vrot.slane %v925, 4
    %v927 = vmax.f32 %v925, %v926
    %v928 = vrot.slane %v927, 2
    %v929 = vmax.f32 %v927, %v928
    %v930 = vrot.slane %v929, 1
    %v931 = vmax.f32 %v929, %v930
    %v932 = vsel %vm804, %v800, -inf
    %v933 = vsel %vm806, %v801, -inf
    %v934 = vmax.f32 %v932, %v933
    %v935 = vrot.slane %v934, 4
    %v936 = vmax.f32 %v934, %v935
    %v937 = vrot.slane %v936, 2
    %v938 = vmax.f32 %v936, %v937
    %v939 = vrot.slane %v938, 1
    %v940 = vmax.f32 %v938, %v939
    %v941 = vsel %vm804, %v802, -inf
    %v942 = vsel %vm806, %v803, -inf
    %v943 = vmax.f32 %v941, %v942
    %v944 = vrot.slane %v943, 4
    %v945 = vmax.f32 %v943, %v944
    %v946 = vrot.slane %v945, 2
    %v947 = vmax.f32 %v945, %v946
    %v948 = vrot.slane %v947, 1
    %v949 = vmax.f32 %v947, %v948
    %vm950 = vcmask 1044480
    %v951 = vrot.slane %v292, 3
    %v952 = vrot.slane %v295, 3
    %v953 = vsel %vm950, %v951, %v952
    %v954 = vrot.slane %v300, 3
    %v955 = vrot.slane %v303, 3
    %v956 = vsel %vm950, %v954, %v955
    %v957 = vrot.slane %v308, 3
    %v958 = vrot.slane %v311, 3
    %v959 = vsel %vm950, %v957, %v958
    %v960 = vrot.slane %v316, 3
    %v961 = vrot.slane %v319, 3
    %v962 = vsel %vm950, %v960, %v961
    %v963 = vrot.slane %v324, 3
    %v964 = vrot.slane %v327, 3
    %v965 = vsel %vm950, %v963, %v964
    %v966 = vrot.slane %v332, 3
    %v967 = vrot.slane %v335, 3
    %v968 = vsel %vm950, %v966, %v967
    %v969 = vrot.slane %v340, 3
    %v970 = vrot.slane %v343, 3
    %v971 = vsel %vm950, %v969, %v970
    %v972 = vrot.slane %v348, 3
    %v973 = vrot.slane %v351, 3
    %v974 = vsel %vm950, %v972, %v973
    %v975 = vrot.slane %v356, 3
    %v976 = vrot.slane %v359, 3
    %v977 = vsel %vm950, %v975, %v976
    %v978 = vrot.slane %v364, 3
    %v979 = vrot.slane %v367, 3
    %v980 = vsel %vm950, %v978, %v979
    %v981 = vrot.slane %v372, 3
    %v982 = vrot.slane %v375, 3
    %v983 = vsel %vm950, %v981, %v982
    %v984 = vrot.slane %v380, 3
    %v985 = vrot.slane %v383, 3
    %v986 = vsel %vm950, %v984, %v985
    %v987 = vrot.slane %v388, 3
    %v988 = vrot.slane %v391, 3
    %v989 = vsel %vm950, %v987, %v988
    %v990 = vrot.slane %v396, 3
    %v991 = vrot.slane %v399, 3
    %v992 = vsel %vm950, %v990, %v991
    %v993 = vrot.slane %v404, 3
    %v994 = vrot.slane %v407, 3
    %v995 = vsel %vm950, %v993, %v994
    %v996 = vrot.slane %v412, 3
    %v997 = vrot.slane %v415, 3
    %v998 = vsel %vm950, %v996, %v997
    %999 = vrot.lane.b32.xlu0 %v953, 104
    %v1000 = vpop.permute.xlu0 %999
    %1001 = vrot.lane.b32.xlu0 %v952, 104
    %v1002 = vpop.permute.xlu0 %1001
    %1003 = vrot.lane.b32.xlu0 %v956, 104
    %v1004 = vpop.permute.xlu0 %1003
    %1005 = vrot.lane.b32.xlu0 %v955, 104
    %v1006 = vpop.permute.xlu0 %1005
    %1007 = vrot.lane.b32.xlu0 %v959, 104
    %v1008 = vpop.permute.xlu0 %1007
    %1009 = vrot.lane.b32.xlu0 %v958, 104
    %v1010 = vpop.permute.xlu0 %1009
    %1011 = vrot.lane.b32.xlu0 %v962, 104
    %v1012 = vpop.permute.xlu0 %1011
    %1013 = vrot.lane.b32.xlu0 %v961, 104
    %v1014 = vpop.permute.xlu0 %1013
    %1015 = vrot.lane.b32.xlu0 %v965, 104
    %v1016 = vpop.permute.xlu0 %1015
    %1017 = vrot.lane.b32.xlu0 %v964, 104
    %v1018 = vpop.permute.xlu0 %1017
    %1019 = vrot.lane.b32.xlu0 %v968, 104
    %v1020 = vpop.permute.xlu0 %1019
    %1021 = vrot.lane.b32.xlu0 %v967, 104
    %v1022 = vpop.permute.xlu0 %1021
    %1023 = vrot.lane.b32.xlu0 %v971, 104
    %v1024 = vpop.permute.xlu0 %1023
    %1025 = vrot.lane.b32.xlu0 %v970, 104
    %v1026 = vpop.permute.xlu0 %1025
    %1027 = vrot.lane.b32.xlu0 %v974, 104
    %v1028 = vpop.permute.xlu0 %1027
    %1029 = vrot.lane.b32.xlu0 %v973, 104
    %v1030 = vpop.permute.xlu0 %1029
    %1031 = vrot.lane.b32.xlu0 %v977, 104
    %v1032 = vpop.permute.xlu0 %1031
    %1033 = vrot.lane.b32.xlu0 %v976, 104
    %v1034 = vpop.permute.xlu0 %1033
    %1035 = vrot.lane.b32.xlu0 %v980, 104
    %v1036 = vpop.permute.xlu0 %1035
    %1037 = vrot.lane.b32.xlu0 %v979, 104
    %v1038 = vpop.permute.xlu0 %1037
    %1039 = vrot.lane.b32.xlu0 %v983, 104
    %v1040 = vpop.permute.xlu0 %1039
    %1041 = vrot.lane.b32.xlu0 %v982, 104
    %v1042 = vpop.permute.xlu0 %1041
    %1043 = vrot.lane.b32.xlu0 %v986, 104
    %v1044 = vpop.permute.xlu0 %1043
    %1045 = vrot.lane.b32.xlu0 %v985, 104
    %v1046 = vpop.permute.xlu0 %1045
    %1047 = vrot.lane.b32.xlu0 %v989, 104
    %v1048 = vpop.permute.xlu0 %1047
    %1049 = vrot.lane.b32.xlu0 %v988, 104
    %v1050 = vpop.permute.xlu0 %1049
    %1051 = vrot.lane.b32.xlu0 %v992, 104
    %v1052 = vpop.permute.xlu0 %1051
    %1053 = vrot.lane.b32.xlu0 %v991, 104
    %v1054 = vpop.permute.xlu0 %1053
    %1055 = vrot.lane.b32.xlu0 %v995, 104
    %v1056 = vpop.permute.xlu0 %1055
    %1057 = vrot.lane.b32.xlu0 %v994, 104
    %v1058 = vpop.permute.xlu0 %1057
    %1059 = vrot.lane.b32.xlu0 %v998, 104
    %v1060 = vpop.permute.xlu0 %1059
    %1061 = vrot.lane.b32.xlu0 %v997, 104
    %v1062 = vpop.permute.xlu0 %1061
    %v1095 = vadd.f32 %v772, %v1000
    %v1096 = vadd.f32 %v773, %v1002
    %v1097 = vadd.f32 %v774, %v1004
    %v1098 = vadd.f32 %v775, %v1006
    %v1099 = vadd.f32 %v776, %v1008
    %v1100 = vadd.f32 %v777, %v1010
    %v1101 = vadd.f32 %v778, %v1012
    %v1102 = vadd.f32 %v779, %v1014
    %v1103 = vadd.f32 %v780, %v1016
    %v1104 = vadd.f32 %v781, %v1018
    %v1105 = vadd.f32 %v782, %v1020
    %v1106 = vadd.f32 %v783, %v1022
    %v1107 = vadd.f32 %v784, %v1024
    %v1108 = vadd.f32 %v785, %v1026
    %v1109 = vadd.f32 %v786, %v1028
    %v1110 = vadd.f32 %v787, %v1030
    %v1111 = vadd.f32 %v788, %v1032
    %v1112 = vadd.f32 %v789, %v1034
    %v1113 = vadd.f32 %v790, %v1036
    %v1114 = vadd.f32 %v791, %v1038
    %v1115 = vadd.f32 %v792, %v1040
    %v1116 = vadd.f32 %v793, %v1042
    %v1117 = vadd.f32 %v794, %v1044
    %v1118 = vadd.f32 %v795, %v1046
    %v1119 = vadd.f32 %v796, %v1048
    %v1120 = vadd.f32 %v797, %v1050
    %v1121 = vadd.f32 %v798, %v1052
    %v1122 = vadd.f32 %v799, %v1054
    %v1123 = vadd.f32 %v800, %v1056
    %v1124 = vadd.f32 %v801, %v1058
    %v1125 = vadd.f32 %v802, %v1060
    %v1126 = vadd.f32 %v803, %v1062
    %vm1127 = vcmask 261312
    %v1128 = vsel %vm1127, %v1095, -inf
    %vm1129 = vcmask 258240
    %v1130 = vsel %vm1129, %v1096, -inf
    %v1131 = vmax.f32 %v1128, %v1130
    %v1132 = vrot.slane %v1131, 4
    %v1133 = vmax.f32 %v1131, %v1132
    %v1134 = vrot.slane %v1133, 2
    %v1135 = vmax.f32 %v1133, %v1134
    %v1136 = vrot.slane %v1135, 1
    %v1137 = vmax.f32 %v1135, %v1136
    %v1138 = vsel %vm1127, %v1097, -inf
    %v1139 = vsel %vm1129, %v1098, -inf
    %v1140 = vmax.f32 %v1138, %v1139
    %v1141 = vrot.slane %v1140, 4
    %v1142 = vmax.f32 %v1140, %v1141
    %v1143 = vrot.slane %v1142, 2
    %v1144 = vmax.f32 %v1142, %v1143
    %v1145 = vrot.slane %v1144, 1
    %v1146 = vmax.f32 %v1144, %v1145
    %v1147 = vsel %vm1127, %v1099, -inf
    %v1148 = vsel %vm1129, %v1100, -inf
    %v1149 = vmax.f32 %v1147, %v1148
    %v1150 = vrot.slane %v1149, 4
    %v1151 = vmax.f32 %v1149, %v1150
    %v1152 = vrot.slane %v1151, 2
    %v1153 = vmax.f32 %v1151, %v1152
    %v1154 = vrot.slane %v1153, 1
    %v1155 = vmax.f32 %v1153, %v1154
    %v1156 = vsel %vm1127, %v1101, -inf
    %v1157 = vsel %vm1129, %v1102, -inf
    %v1158 = vmax.f32 %v1156, %v1157
    %v1159 = vrot.slane %v1158, 4
    %v1160 = vmax.f32 %v1158, %v1159
    %v1161 = vrot.slane %v1160, 2
    %v1162 = vmax.f32 %v1160, %v1161
    %v1163 = vrot.slane %v1162, 1
    %v1164 = vmax.f32 %v1162, %v1163
    %v1165 = vsel %vm1127, %v1103, -inf
    %v1166 = vsel %vm1129, %v1104, -inf
    %v1167 = vmax.f32 %v1165, %v1166
    %v1168 = vrot.slane %v1167, 4
    %v1169 = vmax.f32 %v1167, %v1168
    %v1170 = vrot.slane %v1169, 2
    %v1171 = vmax.f32 %v1169, %v1170
    %v1172 = vrot.slane %v1171, 1
    %v1173 = vmax.f32 %v1171, %v1172
    %v1174 = vsel %vm1127, %v1105, -inf
    %v1175 = vsel %vm1129, %v1106, -inf
    %v1176 = vmax.f32 %v1174, %v1175
    %v1177 = vrot.slane %v1176, 4
    %v1178 = vmax.f32 %v1176, %v1177
    %v1179 = vrot.slane %v1178, 2
    %v1180 = vmax.f32 %v1178, %v1179
    %v1181 = vrot.slane %v1180, 1
    %v1182 = vmax.f32 %v1180, %v1181
    %v1183 = vsel %vm1127, %v1107, -inf
    %v1184 = vsel %vm1129, %v1108, -inf
    %v1185 = vmax.f32 %v1183, %v1184
    %v1186 = vrot.slane %v1185, 4
    %v1187 = vmax.f32 %v1185, %v1186
    %v1188 = vrot.slane %v1187, 2
    %v1189 = vmax.f32 %v1187, %v1188
    %v1190 = vrot.slane %v1189, 1
    %v1191 = vmax.f32 %v1189, %v1190
    %v1192 = vsel %vm1127, %v1109, -inf
    %v1193 = vsel %vm1129, %v1110, -inf
    %v1194 = vmax.f32 %v1192, %v1193
    %v1195 = vrot.slane %v1194, 4
    %v1196 = vmax.f32 %v1194, %v1195
    %v1197 = vrot.slane %v1196, 2
    %v1198 = vmax.f32 %v1196, %v1197
    %v1199 = vrot.slane %v1198, 1
    %v1200 = vmax.f32 %v1198, %v1199
    %v1201 = vsel %vm1127, %v1111, -inf
    %v1202 = vsel %vm1129, %v1112, -inf
    %v1203 = vmax.f32 %v1201, %v1202
    %v1204 = vrot.slane %v1203, 4
    %v1205 = vmax.f32 %v1203, %v1204
    %v1206 = vrot.slane %v1205, 2
    %v1207 = vmax.f32 %v1205, %v1206
    %v1208 = vrot.slane %v1207, 1
    %v1209 = vmax.f32 %v1207, %v1208
    %v1210 = vsel %vm1127, %v1113, -inf
    %v1211 = vsel %vm1129, %v1114, -inf
    %v1212 = vmax.f32 %v1210, %v1211
    %v1213 = vrot.slane %v1212, 4
    %v1214 = vmax.f32 %v1212, %v1213
    %v1215 = vrot.slane %v1214, 2
    %v1216 = vmax.f32 %v1214, %v1215
    %v1217 = vrot.slane %v1216, 1
    %v1218 = vmax.f32 %v1216, %v1217
    %v1219 = vsel %vm1127, %v1115, -inf
    %v1220 = vsel %vm1129, %v1116, -inf
    %v1221 = vmax.f32 %v1219, %v1220
    %v1222 = vrot.slane %v1221, 4
    %v1223 = vmax.f32 %v1221, %v1222
    %v1224 = vrot.slane %v1223, 2
    %v1225 = vmax.f32 %v1223, %v1224
    %v1226 = vrot.slane %v1225, 1
    %v1227 = vmax.f32 %v1225, %v1226
    %v1228 = vsel %vm1127, %v1117, -inf
    %v1229 = vsel %vm1129, %v1118, -inf
    %v1230 = vmax.f32 %v1228, %v1229
    %v1231 = vrot.slane %v1230, 4
    %v1232 = vmax.f32 %v1230, %v1231
    %v1233 = vrot.slane %v1232, 2
    %v1234 = vmax.f32 %v1232, %v1233
    %v1235 = vrot.slane %v1234, 1
    %v1236 = vmax.f32 %v1234, %v1235
    %v1237 = vsel %vm1127, %v1119, -inf
    %v1238 = vsel %vm1129, %v1120, -inf
    %v1239 = vmax.f32 %v1237, %v1238
    %v1240 = vrot.slane %v1239, 4
    %v1241 = vmax.f32 %v1239, %v1240
    %v1242 = vrot.slane %v1241, 2
    %v1243 = vmax.f32 %v1241, %v1242
    %v1244 = vrot.slane %v1243, 1
    %v1245 = vmax.f32 %v1243, %v1244
    %v1246 = vsel %vm1127, %v1121, -inf
    %v1247 = vsel %vm1129, %v1122, -inf
    %v1248 = vmax.f32 %v1246, %v1247
    %v1249 = vrot.slane %v1248, 4
    %v1250 = vmax.f32 %v1248, %v1249
    %v1251 = vrot.slane %v1250, 2
    %v1252 = vmax.f32 %v1250, %v1251
    %v1253 = vrot.slane %v1252, 1
    %v1254 = vmax.f32 %v1252, %v1253
    %v1255 = vsel %vm1127, %v1123, -inf
    %v1256 = vsel %vm1129, %v1124, -inf
    %v1257 = vmax.f32 %v1255, %v1256
    %v1258 = vrot.slane %v1257, 4
    %v1259 = vmax.f32 %v1257, %v1258
    %v1260 = vrot.slane %v1259, 2
    %v1261 = vmax.f32 %v1259, %v1260
    %v1262 = vrot.slane %v1261, 1
    %v1263 = vmax.f32 %v1261, %v1262
    %v1264 = vsel %vm1127, %v1125, -inf
    %v1265 = vsel %vm1129, %v1126, -inf
    %v1266 = vmax.f32 %v1264, %v1265
    %v1267 = vrot.slane %v1266, 4
    %v1268 = vmax.f32 %v1266, %v1267
    %v1269 = vrot.slane %v1268, 2
    %v1270 = vmax.f32 %v1268, %v1269
    %v1271 = vrot.slane %v1270, 1
    %v1272 = vmax.f32 %v1270, %v1271
    %vm1273 = vcmask 1043456
    %v1274 = vrot.slane %v292, 4
    %v1275 = vrot.slane %v295, 4
    %v1276 = vsel %vm1273, %v1274, %v1275
    %v1277 = vrot.slane %v300, 4
    %v1278 = vrot.slane %v303, 4
    %v1279 = vsel %vm1273, %v1277, %v1278
    %v1280 = vrot.slane %v308, 4
    %v1281 = vrot.slane %v311, 4
    %v1282 = vsel %vm1273, %v1280, %v1281
    %v1283 = vrot.slane %v316, 4
    %v1284 = vrot.slane %v319, 4
    %v1285 = vsel %vm1273, %v1283, %v1284
    %v1286 = vrot.slane %v324, 4
    %v1287 = vrot.slane %v327, 4
    %v1288 = vsel %vm1273, %v1286, %v1287
    %v1289 = vrot.slane %v332, 4
    %v1290 = vrot.slane %v335, 4
    %v1291 = vsel %vm1273, %v1289, %v1290
    %v1292 = vrot.slane %v340, 4
    %v1293 = vrot.slane %v343, 4
    %v1294 = vsel %vm1273, %v1292, %v1293
    %v1295 = vrot.slane %v348, 4
    %v1296 = vrot.slane %v351, 4
    %v1297 = vsel %vm1273, %v1295, %v1296
    %v1298 = vrot.slane %v356, 4
    %v1299 = vrot.slane %v359, 4
    %v1300 = vsel %vm1273, %v1298, %v1299
    %v1301 = vrot.slane %v364, 4
    %v1302 = vrot.slane %v367, 4
    %v1303 = vsel %vm1273, %v1301, %v1302
    %v1304 = vrot.slane %v372, 4
    %v1305 = vrot.slane %v375, 4
    %v1306 = vsel %vm1273, %v1304, %v1305
    %v1307 = vrot.slane %v380, 4
    %v1308 = vrot.slane %v383, 4
    %v1309 = vsel %vm1273, %v1307, %v1308
    %v1310 = vrot.slane %v388, 4
    %v1311 = vrot.slane %v391, 4
    %v1312 = vsel %vm1273, %v1310, %v1311
    %v1313 = vrot.slane %v396, 4
    %v1314 = vrot.slane %v399, 4
    %v1315 = vsel %vm1273, %v1313, %v1314
    %v1316 = vrot.slane %v404, 4
    %v1317 = vrot.slane %v407, 4
    %v1318 = vsel %vm1273, %v1316, %v1317
    %v1319 = vrot.slane %v412, 4
    %v1320 = vrot.slane %v415, 4
    %v1321 = vsel %vm1273, %v1319, %v1320
    %1322 = vrot.lane.b32.xlu0 %v1276, 96
    %v1323 = vpop.permute.xlu0 %1322
    %1324 = vrot.lane.b32.xlu0 %v1275, 96
    %v1325 = vpop.permute.xlu0 %1324
    %1326 = vrot.lane.b32.xlu0 %v1279, 96
    %v1327 = vpop.permute.xlu0 %1326
    %1328 = vrot.lane.b32.xlu0 %v1278, 96
    %v1329 = vpop.permute.xlu0 %1328
    %1330 = vrot.lane.b32.xlu0 %v1282, 96
    %v1331 = vpop.permute.xlu0 %1330
    %1332 = vrot.lane.b32.xlu0 %v1281, 96
    %v1333 = vpop.permute.xlu0 %1332
    %1334 = vrot.lane.b32.xlu0 %v1285, 96
    %v1335 = vpop.permute.xlu0 %1334
    %1336 = vrot.lane.b32.xlu0 %v1284, 96
    %v1337 = vpop.permute.xlu0 %1336
    %1338 = vrot.lane.b32.xlu0 %v1288, 96
    %v1339 = vpop.permute.xlu0 %1338
    %1340 = vrot.lane.b32.xlu0 %v1287, 96
    %v1341 = vpop.permute.xlu0 %1340
    %1342 = vrot.lane.b32.xlu0 %v1291, 96
    %v1343 = vpop.permute.xlu0 %1342
    %1344 = vrot.lane.b32.xlu0 %v1290, 96
    %v1345 = vpop.permute.xlu0 %1344
    %1346 = vrot.lane.b32.xlu0 %v1294, 96
    %v1347 = vpop.permute.xlu0 %1346
    %1348 = vrot.lane.b32.xlu0 %v1293, 96
    %v1349 = vpop.permute.xlu0 %1348
    %1350 = vrot.lane.b32.xlu0 %v1297, 96
    %v1351 = vpop.permute.xlu0 %1350
    %1352 = vrot.lane.b32.xlu0 %v1296, 96
    %v1353 = vpop.permute.xlu0 %1352
    %1354 = vrot.lane.b32.xlu0 %v1300, 96
    %v1355 = vpop.permute.xlu0 %1354
    %1356 = vrot.lane.b32.xlu0 %v1299, 96
    %v1357 = vpop.permute.xlu0 %1356
    %1358 = vrot.lane.b32.xlu0 %v1303, 96
    %v1359 = vpop.permute.xlu0 %1358
    %1360 = vrot.lane.b32.xlu0 %v1302, 96
    %v1361 = vpop.permute.xlu0 %1360
    %1362 = vrot.lane.b32.xlu0 %v1306, 96
    %v1363 = vpop.permute.xlu0 %1362
    %1364 = vrot.lane.b32.xlu0 %v1305, 96
    %v1365 = vpop.permute.xlu0 %1364
    %1366 = vrot.lane.b32.xlu0 %v1309, 96
    %v1367 = vpop.permute.xlu0 %1366
    %1368 = vrot.lane.b32.xlu0 %v1308, 96
    %v1369 = vpop.permute.xlu0 %1368
    %1370 = vrot.lane.b32.xlu0 %v1312, 96
    %v1371 = vpop.permute.xlu0 %1370
    %1372 = vrot.lane.b32.xlu0 %v1311, 96
    %v1373 = vpop.permute.xlu0 %1372
    %1374 = vrot.lane.b32.xlu0 %v1315, 96
    %v1375 = vpop.permute.xlu0 %1374
    %1376 = vrot.lane.b32.xlu0 %v1314, 96
    %v1377 = vpop.permute.xlu0 %1376
    %1378 = vrot.lane.b32.xlu0 %v1318, 96
    %v1379 = vpop.permute.xlu0 %1378
    %1380 = vrot.lane.b32.xlu0 %v1317, 96
    %v1381 = vpop.permute.xlu0 %1380
    %1382 = vrot.lane.b32.xlu0 %v1321, 96
    %v1383 = vpop.permute.xlu0 %1382
    %1384 = vrot.lane.b32.xlu0 %v1320, 96
    %v1385 = vpop.permute.xlu0 %1384
    %v1418 = vadd.f32 %v1095, %v1323
    %v1419 = vadd.f32 %v1096, %v1325
    %v1420 = vadd.f32 %v1097, %v1327
    %v1421 = vadd.f32 %v1098, %v1329
    %v1422 = vadd.f32 %v1099, %v1331
    %v1423 = vadd.f32 %v1100, %v1333
    %v1424 = vadd.f32 %v1101, %v1335
    %v1425 = vadd.f32 %v1102, %v1337
    %v1426 = vadd.f32 %v1103, %v1339
    %v1427 = vadd.f32 %v1104, %v1341
    %v1428 = vadd.f32 %v1105, %v1343
    %v1429 = vadd.f32 %v1106, %v1345
    %v1430 = vadd.f32 %v1107, %v1347
    %v1431 = vadd.f32 %v1108, %v1349
    %v1432 = vadd.f32 %v1109, %v1351
    %v1433 = vadd.f32 %v1110, %v1353
    %v1434 = vadd.f32 %v1111, %v1355
    %v1435 = vadd.f32 %v1112, %v1357
    %v1436 = vadd.f32 %v1113, %v1359
    %v1437 = vadd.f32 %v1114, %v1361
    %v1438 = vadd.f32 %v1115, %v1363
    %v1439 = vadd.f32 %v1116, %v1365
    %v1440 = vadd.f32 %v1117, %v1367
    %v1441 = vadd.f32 %v1118, %v1369
    %v1442 = vadd.f32 %v1119, %v1371
    %v1443 = vadd.f32 %v1120, %v1373
    %v1444 = vadd.f32 %v1121, %v1375
    %v1445 = vadd.f32 %v1122, %v1377
    %v1446 = vadd.f32 %v1123, %v1379
    %v1447 = vadd.f32 %v1124, %v1381
    %v1448 = vadd.f32 %v1125, %v1383
    %v1449 = vadd.f32 %v1126, %v1385
    %vm1450 = vcmask 523712
    %v1451 = vsel %vm1450, %v1418, -inf
    %vm1452 = vcmask 519616
    %v1453 = vsel %vm1452, %v1419, -inf
    %v1454 = vmax.f32 %v1451, %v1453
    %v1455 = vrot.slane %v1454, 4
    %v1456 = vmax.f32 %v1454, %v1455
    %v1457 = vrot.slane %v1456, 2
    %v1458 = vmax.f32 %v1456, %v1457
    %v1459 = vrot.slane %v1458, 1
    %v1460 = vmax.f32 %v1458, %v1459
    %v1461 = vsel %vm1450, %v1420, -inf
    %v1462 = vsel %vm1452, %v1421, -inf
    %v1463 = vmax.f32 %v1461, %v1462
    %v1464 = vrot.slane %v1463, 4
    %v1465 = vmax.f32 %v1463, %v1464
    %v1466 = vrot.slane %v1465, 2
    %v1467 = vmax.f32 %v1465, %v1466
    %v1468 = vrot.slane %v1467, 1
    %v1469 = vmax.f32 %v1467, %v1468
    %v1470 = vsel %vm1450, %v1422, -inf
    %v1471 = vsel %vm1452, %v1423, -inf
    %v1472 = vmax.f32 %v1470, %v1471
    %v1473 = vrot.slane %v1472, 4
    %v1474 = vmax.f32 %v1472, %v1473
    %v1475 = vrot.slane %v1474, 2
    %v1476 = vmax.f32 %v1474, %v1475
    %v1477 = vrot.slane %v1476, 1
    %v1478 = vmax.f32 %v1476, %v1477
    %v1479 = vsel %vm1450, %v1424, -inf
    %v1480 = vsel %vm1452, %v1425, -inf
    %v1481 = vmax.f32 %v1479, %v1480
    %v1482 = vrot.slane %v1481, 4
    %v1483 = vmax.f32 %v1481, %v1482
    %v1484 = vrot.slane %v1483, 2
    %v1485 = vmax.f32 %v1483, %v1484
    %v1486 = vrot.slane %v1485, 1
    %v1487 = vmax.f32 %v1485, %v1486
    %v1488 = vsel %vm1450, %v1426, -inf
    %v1489 = vsel %vm1452, %v1427, -inf
    %v1490 = vmax.f32 %v1488, %v1489
    %v1491 = vrot.slane %v1490, 4
    %v1492 = vmax.f32 %v1490, %v1491
    %v1493 = vrot.slane %v1492, 2
    %v1494 = vmax.f32 %v1492, %v1493
    %v1495 = vrot.slane %v1494, 1
    %v1496 = vmax.f32 %v1494, %v1495
    %v1497 = vsel %vm1450, %v1428, -inf
    %v1498 = vsel %vm1452, %v1429, -inf
    %v1499 = vmax.f32 %v1497, %v1498
    %v1500 = vrot.slane %v1499, 4
    %v1501 = vmax.f32 %v1499, %v1500
    %v1502 = vrot.slane %v1501, 2
    %v1503 = vmax.f32 %v1501, %v1502
    %v1504 = vrot.slane %v1503, 1
    %v1505 = vmax.f32 %v1503, %v1504
    %v1506 = vsel %vm1450, %v1430, -inf
    %v1507 = vsel %vm1452, %v1431, -inf
    %v1508 = vmax.f32 %v1506, %v1507
    %v1509 = vrot.slane %v1508, 4
    %v1510 = vmax.f32 %v1508, %v1509
    %v1511 = vrot.slane %v1510, 2
    %v1512 = vmax.f32 %v1510, %v1511
    %v1513 = vrot.slane %v1512, 1
    %v1514 = vmax.f32 %v1512, %v1513
    %v1515 = vsel %vm1450, %v1432, -inf
    %v1516 = vsel %vm1452, %v1433, -inf
    %v1517 = vmax.f32 %v1515, %v1516
    %v1518 = vrot.slane %v1517, 4
    %v1519 = vmax.f32 %v1517, %v1518
    %v1520 = vrot.slane %v1519, 2
    %v1521 = vmax.f32 %v1519, %v1520
    %v1522 = vrot.slane %v1521, 1
    %v1523 = vmax.f32 %v1521, %v1522
    %v1524 = vsel %vm1450, %v1434, -inf
    %v1525 = vsel %vm1452, %v1435, -inf
    %v1526 = vmax.f32 %v1524, %v1525
    %v1527 = vrot.slane %v1526, 4
    %v1528 = vmax.f32 %v1526, %v1527
    %v1529 = vrot.slane %v1528, 2
    %v1530 = vmax.f32 %v1528, %v1529
    %v1531 = vrot.slane %v1530, 1
    %v1532 = vmax.f32 %v1530, %v1531
    %v1533 = vsel %vm1450, %v1436, -inf
    %v1534 = vsel %vm1452, %v1437, -inf
    %v1535 = vmax.f32 %v1533, %v1534
    %v1536 = vrot.slane %v1535, 4
    %v1537 = vmax.f32 %v1535, %v1536
    %v1538 = vrot.slane %v1537, 2
    %v1539 = vmax.f32 %v1537, %v1538
    %v1540 = vrot.slane %v1539, 1
    %v1541 = vmax.f32 %v1539, %v1540
    %v1542 = vsel %vm1450, %v1438, -inf
    %v1543 = vsel %vm1452, %v1439, -inf
    %v1544 = vmax.f32 %v1542, %v1543
    %v1545 = vrot.slane %v1544, 4
    %v1546 = vmax.f32 %v1544, %v1545
    %v1547 = vrot.slane %v1546, 2
    %v1548 = vmax.f32 %v1546, %v1547
    %v1549 = vrot.slane %v1548, 1
    %v1550 = vmax.f32 %v1548, %v1549
    %v1551 = vsel %vm1450, %v1440, -inf
    %v1552 = vsel %vm1452, %v1441, -inf
    %v1553 = vmax.f32 %v1551, %v1552
    %v1554 = vrot.slane %v1553, 4
    %v1555 = vmax.f32 %v1553, %v1554
    %v1556 = vrot.slane %v1555, 2
    %v1557 = vmax.f32 %v1555, %v1556
    %v1558 = vrot.slane %v1557, 1
    %v1559 = vmax.f32 %v1557, %v1558
    %v1560 = vsel %vm1450, %v1442, -inf
    %v1561 = vsel %vm1452, %v1443, -inf
    %v1562 = vmax.f32 %v1560, %v1561
    %v1563 = vrot.slane %v1562, 4
    %v1564 = vmax.f32 %v1562, %v1563
    %v1565 = vrot.slane %v1564, 2
    %v1566 = vmax.f32 %v1564, %v1565
    %v1567 = vrot.slane %v1566, 1
    %v1568 = vmax.f32 %v1566, %v1567
    %v1569 = vsel %vm1450, %v1444, -inf
    %v1570 = vsel %vm1452, %v1445, -inf
    %v1571 = vmax.f32 %v1569, %v1570
    %v1572 = vrot.slane %v1571, 4
    %v1573 = vmax.f32 %v1571, %v1572
    %v1574 = vrot.slane %v1573, 2
    %v1575 = vmax.f32 %v1573, %v1574
    %v1576 = vrot.slane %v1575, 1
    %v1577 = vmax.f32 %v1575, %v1576
    %v1578 = vsel %vm1450, %v1446, -inf
    %v1579 = vsel %vm1452, %v1447, -inf
    %v1580 = vmax.f32 %v1578, %v1579
    %v1581 = vrot.slane %v1580, 4
    %v1582 = vmax.f32 %v1580, %v1581
    %v1583 = vrot.slane %v1582, 2
    %v1584 = vmax.f32 %v1582, %v1583
    %v1585 = vrot.slane %v1584, 1
    %v1586 = vmax.f32 %v1584, %v1585
    %v1587 = vsel %vm1450, %v1448, -inf
    %v1588 = vsel %vm1452, %v1449, -inf
    %v1589 = vmax.f32 %v1587, %v1588
    %v1590 = vrot.slane %v1589, 4
    %v1591 = vmax.f32 %v1589, %v1590
    %v1592 = vrot.slane %v1591, 2
    %v1593 = vmax.f32 %v1591, %v1592
    %v1594 = vrot.slane %v1593, 1
    %v1595 = vmax.f32 %v1593, %v1594
    %vm1612 = vcmask 1041409
    %v1613 = vsel %vm1612, %v823, %v814
    %vm1614 = vcmask 1042434
    %v1615 = vsel %vm1614, %v832, %v1613
    %vm1616 = vcmask 1043459
    %v1617 = vsel %vm1616, %v841, %v1615
    %vm1618 = vcmask 1044484
    %v1619 = vsel %vm1618, %v850, %v1617
    %vm1620 = vcmask 1045509
    %v1621 = vsel %vm1620, %v859, %v1619
    %vm1622 = vcmask 1046534
    %v1623 = vsel %vm1622, %v868, %v1621
    %vm1624 = vcmask 1047559
    %v1625 = vsel %vm1624, %v877, %v1623
    %v1626 = vsel %vm1612, %v895, %v886
    %v1627 = vsel %vm1614, %v904, %v1626
    %v1628 = vsel %vm1616, %v913, %v1627
    %v1629 = vsel %vm1618, %v922, %v1628
    %v1630 = vsel %vm1620, %v931, %v1629
    %v1631 = vsel %vm1622, %v940, %v1630
    %v1632 = vsel %vm1624, %v949, %v1631
    %v1651 = vsel %vm1612, %v1146, %v1137
    %v1652 = vsel %vm1614, %v1155, %v1651
    %v1653 = vsel %vm1616, %v1164, %v1652
    %v1654 = vsel %vm1618, %v1173, %v1653
    %v1655 = vsel %vm1620, %v1182, %v1654
    %v1656 = vsel %vm1622, %v1191, %v1655
    %v1657 = vsel %vm1624, %v1200, %v1656
    %v1658 = vsel %vm1612, %v1218, %v1209
    %v1659 = vsel %vm1614, %v1227, %v1658
    %v1660 = vsel %vm1616, %v1236, %v1659
    %v1661 = vsel %vm1618, %v1245, %v1660
    %v1662 = vsel %vm1620, %v1254, %v1661
    %v1663 = vsel %vm1622, %v1263, %v1662
    %v1664 = vsel %vm1624, %v1272, %v1663
    %1665 = vrot.lane.b32.xlu0 %v1657, 112
    %v1666 = vpop.permute.xlu0 %1665
    %1667 = vrot.lane.b32.xlu0 %v1664, 112
    %v1668 = vpop.permute.xlu0 %1667
    %v1687 = vsel %vm1612, %v1469, %v1460
    %v1688 = vsel %vm1614, %v1478, %v1687
    %v1689 = vsel %vm1616, %v1487, %v1688
    %v1690 = vsel %vm1618, %v1496, %v1689
    %v1691 = vsel %vm1620, %v1505, %v1690
    %v1692 = vsel %vm1622, %v1514, %v1691
    %v1693 = vsel %vm1624, %v1523, %v1692
    %v1694 = vsel %vm1612, %v1541, %v1532
    %v1695 = vsel %vm1614, %v1550, %v1694
    %v1696 = vsel %vm1616, %v1559, %v1695
    %v1697 = vsel %vm1618, %v1568, %v1696
    %v1698 = vsel %vm1620, %v1577, %v1697
    %v1699 = vsel %vm1622, %v1586, %v1698
    %v1700 = vsel %vm1624, %v1595, %v1699
    %1701 = vrot.lane.b32.xlu0 %v1693, 88
    %v1702 = vpop.permute.xlu0 %1701
    %1703 = vrot.lane.b32.xlu0 %v1700, 88
    %v1704 = vpop.permute.xlu0 %1703
    %v1707 = vsel %vm804, %v1625, %v1666
    %v1708 = vsel %vm804, %v1632, %v1668
    %vm1709 = vcmask 130048
    %v1710 = vsel %vm1709, %v1707, %v1702
    %v1711 = vsel %vm1709, %v1708, %v1704
    %vm1712 = vcmask 195584
    %v1713 = vsel %vm1712, %v1710, 0.0
    %v1714 = vsel %vm1712, %v1711, 0.0
    %v1715 = vmax.f32 %v1713, 0.0
    %v1716 = vmax.f32 %v1714, 0.0
    %v1717 = vpack.c.bf16 %v1716, %v1715
    %v1718 = vld [vmem:[#allocation7] sm:$0xf]
    %v1719 = vld [vmem:[#allocation7 + $0x4] sm:$0xf]
    %v1720 = vld [vmem:[#allocation7 + $0x8] sm:$0xf]
    %v1721 = vld [vmem:[#allocation7 + $0xc] sm:$0xf]
    %v1722 = vld [vmem:[#allocation7 + $0x10] sm:$0xf]
    %v1723 = vld [vmem:[#allocation7 + $0x14] sm:$0xf]
    %v1724 = vld [vmem:[#allocation7 + $0x18] sm:$0xf]
    %v1725 = vld [vmem:[#allocation7 + $0x1c] sm:$0xf]
    %v1726 = vld [vmem:[#allocation7 + $0x20] sm:$0xf]
    %v1727 = vld [vmem:[#allocation7 + $0x24] sm:$0xf]
    %v1728 = vld [vmem:[#allocation7 + $0x28] sm:$0xf]
    %v1729 = vld [vmem:[#allocation7 + $0x2c] sm:$0xf]
    %v1730 = vld [vmem:[#allocation7 + $0x30] sm:$0xf]
    %v1731 = vld [vmem:[#allocation7 + $0x34] sm:$0xf]
    %v1732 = vld [vmem:[#allocation7 + $0x38] sm:$0xf]
    %v1733 = vld [vmem:[#allocation7 + $0x3c] sm:$0xf]
    %v1734 = vld [vmem:[%s3] sm:$0x1]
    %v1736 = vlaneseq
    %v1737 = vshrl.u32 %v1736, 7
    %v1738 = vsub.s32 0, %v1737
    %v1739 = vrot.slane %v1734, %v1738
    %v1757 = vunpack.c.l.b16 %v1718
    %v1758 = vunpack.c.l.b16 %v1719
    %v1759 = vunpack.c.l.b16 %v1720
    %v1760 = vunpack.c.l.b16 %v1721
    %v1761 = vunpack.c.l.b16 %v1722
    %v1762 = vunpack.c.l.b16 %v1723
    %v1763 = vunpack.c.l.b16 %v1724
    %v1764 = vunpack.c.l.b16 %v1725
    %v1765 = vunpack.c.l.b16 %v1726
    %v1766 = vunpack.c.l.b16 %v1727
    %v1767 = vunpack.c.l.b16 %v1728
    %v1768 = vunpack.c.l.b16 %v1729
    %v1769 = vunpack.c.l.b16 %v1730
    %v1770 = vunpack.c.l.b16 %v1731
    %v1771 = vunpack.c.l.b16 %v1732
    %v1772 = vunpack.c.l.b16 %v1733
    %v1773 = vpack.c.b16 %v1758, %v1757
    %v1774 = vpack.c.b16 %v1760, %v1759
    %v1775 = vpack.c.b16 %v1762, %v1761
    %v1776 = vpack.c.b16 %v1764, %v1763
    %v1777 = vpack.c.b16 %v1766, %v1765
    %v1778 = vpack.c.b16 %v1768, %v1767
    %v1779 = vpack.c.b16 %v1770, %v1769
    %v1780 = vpack.c.b16 %v1772, %v1771
    %1789 = vmatprep.subr.bf16.mxu0 0
    %1790 = vmatpush1.bf16.msra.mxu0 %v1773
    %1791 = vmatprep.subr.bf16.mxu0 0
    %1792 = vmatpush1.bf16.msra.mxu0 %v1774
    %1793 = vmatprep.subr.bf16.mxu0 0
    %1794 = vmatpush1.bf16.msra.mxu0 %v1775
    %1795 = vmatprep.subr.bf16.mxu0 0
    %1796 = vmatpush1.bf16.msra.mxu0 %v1776
    %1797 = vmatprep.subr.bf16.mxu0 0
    %1798 = vmatpush1.bf16.msra.mxu0 %v1777
    %1799 = vmatprep.subr.bf16.mxu0 0
    %1800 = vmatpush1.bf16.msra.mxu0 %v1778
    %1801 = vmatprep.subr.bf16.mxu0 0
    %1802 = vmatpush1.bf16.msra.mxu0 %v1779
    %1803 = vmatprep.subr.bf16.mxu0 0
    %1804 = vmatpush1.bf16.msra.mxu0 %v1780
    %1805 = vmatprep.subr.bf16.mxu0 0
    %1806 = vmatpush1.bf16.msra.mxu0 0
    %1807 = vmatprep.subr.bf16.mxu0 0
    %1808 = vmatpush1.bf16.msra.mxu0 0
    %1809 = vmatprep.subr.bf16.mxu0 0
    %1810 = vmatpush1.bf16.msra.mxu0 0
    %1811 = vmatprep.subr.bf16.mxu0 0
    %1812 = vmatpush1.bf16.msra.mxu0 0
    %1813 = vmatprep.subr.bf16.mxu0 0
    %1814 = vmatpush1.bf16.msra.mxu0 0
    %1815 = vmatprep.subr.bf16.mxu0 0
    %1816 = vmatpush1.bf16.msra.mxu0 0
    %1817 = vmatprep.subr.bf16.mxu0 0
    %1818 = vmatpush1.bf16.msra.mxu0 0
    %1819 = vmatprep.subr.bf16.mxu0 0
    %1820 = vmatpush1.bf16.msra.mxu0 0
    %1821 = vmatprep.mubr.bf16.mxu0 0
    %1822 = vmatmul.mubr.bf16.gmra.mrb[0].mxu0 %v1717
    %v1823 = vpop.f32.mrb[0].mxu0
    %v1824 = vadd.f32 %v1739, %v1823
    %v1825 = vpop.f32.mrb[0].mxu0
    %v1826 = vpop.f32.mrb[0].mxu0
    %v1827 = vadd.f32 %v1739, %v1826
    %v1828 = vpop.f32.mrb[0].mxu0
    %1829 = vdwg.mxu0
    %v1830 = vmax.f32 %v1824, 0.0
    %v1831 = vmax.f32 %v1827, 0.0
    %v1832 = vpack.c.bf16 %v1831, %v1830
    %v1833 = vld [vmem:[#allocation8] sm:$0xf]
    %v1834 = vld [vmem:[#allocation8 + $0x4] sm:$0xf]
    %v1835 = vld [vmem:[#allocation8 + $0x8] sm:$0xf]
    %v1836 = vld [vmem:[#allocation8 + $0xc] sm:$0xf]
    %v1837 = vld [vmem:[#allocation8 + $0x10] sm:$0xf]
    %v1838 = vld [vmem:[#allocation8 + $0x14] sm:$0xf]
    %v1839 = vld [vmem:[#allocation8 + $0x18] sm:$0xf]
    %v1840 = vld [vmem:[#allocation8 + $0x1c] sm:$0xf]
    %v1841 = vld [vmem:[#allocation8 + $0x20] sm:$0xf]
    %v1842 = vld [vmem:[#allocation8 + $0x24] sm:$0xf]
    %v1843 = vld [vmem:[#allocation8 + $0x28] sm:$0xf]
    %v1844 = vld [vmem:[#allocation8 + $0x2c] sm:$0xf]
    %v1845 = vld [vmem:[#allocation8 + $0x30] sm:$0xf]
    %v1846 = vld [vmem:[#allocation8 + $0x34] sm:$0xf]
    %v1847 = vld [vmem:[#allocation8 + $0x38] sm:$0xf]
    %v1848 = vld [vmem:[#allocation8 + $0x3c] sm:$0xf]
    %v1849 = vld [vmem:[%s5] sm:$0x1]
    %v1851 = vlaneseq
    %v1852 = vshrl.u32 %v1851, 7
    %v1853 = vsub.s32 0, %v1852
    %v1854 = vrot.slane %v1849, %v1853
    %v1872 = vunpack.c.l.b16 %v1833
    %v1873 = vunpack.c.l.b16 %v1834
    %v1874 = vunpack.c.l.b16 %v1835
    %v1875 = vunpack.c.l.b16 %v1836
    %v1876 = vunpack.c.l.b16 %v1837
    %v1877 = vunpack.c.l.b16 %v1838
    %v1878 = vunpack.c.l.b16 %v1839
    %v1879 = vunpack.c.l.b16 %v1840
    %v1880 = vunpack.c.l.b16 %v1841
    %v1881 = vunpack.c.l.b16 %v1842
    %v1882 = vunpack.c.l.b16 %v1843
    %v1883 = vunpack.c.l.b16 %v1844
    %v1884 = vunpack.c.l.b16 %v1845
    %v1885 = vunpack.c.l.b16 %v1846
    %v1886 = vunpack.c.l.b16 %v1847
    %v1887 = vunpack.c.l.b16 %v1848
    %v1888 = vpack.c.b16 %v1873, %v1872
    %v1889 = vpack.c.b16 %v1875, %v1874
    %v1890 = vpack.c.b16 %v1877, %v1876
    %v1891 = vpack.c.b16 %v1879, %v1878
    %v1892 = vpack.c.b16 %v1881, %v1880
    %v1893 = vpack.c.b16 %v1883, %v1882
    %v1894 = vpack.c.b16 %v1885, %v1884
    %v1895 = vpack.c.b16 %v1887, %v1886
    %1904 = vmatprep.subr.bf16.mxu0 0
    %1905 = vmatpush1.bf16.msra.mxu0 %v1888
    %1906 = vmatprep.subr.bf16.mxu0 0
    %1907 = vmatpush1.bf16.msra.mxu0 %v1889
    %1908 = vmatprep.subr.bf16.mxu0 0
    %1909 = vmatpush1.bf16.msra.mxu0 %v1890
    %1910 = vmatprep.subr.bf16.mxu0 0
    %1911 = vmatpush1.bf16.msra.mxu0 %v1891
    %1912 = vmatprep.subr.bf16.mxu0 0
    %1913 = vmatpush1.bf16.msra.mxu0 %v1892
    %1914 = vmatprep.subr.bf16.mxu0 0
    %1915 = vmatpush1.bf16.msra.mxu0 %v1893
    %1916 = vmatprep.subr.bf16.mxu0 0
    %1917 = vmatpush1.bf16.msra.mxu0 %v1894
    %1918 = vmatprep.subr.bf16.mxu0 0
    %1919 = vmatpush1.bf16.msra.mxu0 %v1895
    %1920 = vmatprep.subr.bf16.mxu0 0
    %1921 = vmatpush1.bf16.msra.mxu0 0
    %1922 = vmatprep.subr.bf16.mxu0 0
    %1923 = vmatpush1.bf16.msra.mxu0 0
    %1924 = vmatprep.subr.bf16.mxu0 0
    %1925 = vmatpush1.bf16.msra.mxu0 0
    %1926 = vmatprep.subr.bf16.mxu0 0
    %1927 = vmatpush1.bf16.msra.mxu0 0
    %1928 = vmatprep.subr.bf16.mxu0 0
    %1929 = vmatpush1.bf16.msra.mxu0 0
    %1930 = vmatprep.subr.bf16.mxu0 0
    %1931 = vmatpush1.bf16.msra.mxu0 0
    %1932 = vmatprep.subr.bf16.mxu0 0
    %1933 = vmatpush1.bf16.msra.mxu0 0
    %1934 = vmatprep.subr.bf16.mxu0 0
    %1935 = vmatpush1.bf16.msra.mxu0 0
    %1936 = vmatprep.mubr.bf16.mxu0 0
    %1937 = vmatmul.mubr.bf16.gmra.mrb[0].mxu0 %v1832
    %v1938 = vpop.f32.mrb[0].mxu0
    %v1939 = vadd.f32 %v1854, %v1938
    %v1940 = vpop.f32.mrb[0].mxu0
    %v1941 = vpop.f32.mrb[0].mxu0
    %v1942 = vadd.f32 %v1854, %v1941
    %v1943 = vpop.f32.mrb[0].mxu0
    %1944 = vdwg.mxu0
    %1945 = vst [vmem:[#allocation10] sm:$0xff] %v1939
    %1946 = vst [vmem:[#allocation10 + $0x8] sm:$0xff] %v1942
    // Predicated region
    $region42: #{tpu_custom_call.1} parent=1 // pred_check
      _
    $region43: #{tpu_custom_call.1} parent=1 // pred_check_branch
      %1948 = sbr.rel (0) target = $region45
    $region44: #{tpu_custom_call.1} parent=1 // pred_region
      %s1950 = ssub.s32 256, 256
      %1951 = vsyncadd [#allocation4], %s1950
      %s1952 = sshll.u32 [#allocation10], 4
      %s1953 = int_to_ptr.vmem [resolvable:$true] %s1952
      %1958 = dma.vmem_to_hbm [thread:$0]  %s1953, 256, %s6, [#allocation4], 128, 128, 8
    $region45: #{tpu_custom_call.1} parent=1 // pred_fallthru
      _
    // Predicated region
    $region46: #{tpu_custom_call.1} parent=1 // pred_check
      _
    $region47: #{tpu_custom_call.1} parent=1 // pred_check_branch
      %1960 = sbr.rel (0) target = $region49
    $region48: #{tpu_custom_call.1} parent=1 // pred_region
      %1961 = dma.done [#allocation4], 256
    $region49: #{tpu_custom_call.1} parent=1 // pred_fallthru
      _
    %1962 = vsyncpa [#allocation3], 1
    %1963 = vsyncpa [#allocation6], 1
    %1964 = vsyncpa [#allocation9], 1
    %1965 = vsyncpa [#allocation4], 1

</llo_original>
